<compile_context>
chip_gen: v5e
topology: v5e:2x2
jax: 0.10.0
libtpu: 0.0.40
codegen_flags: <defaults>
</compile_context>

<pallas_src>
import jax
import jax.numpy as jnp
from jax import lax
from jax.experimental import pallas as pl
from jax.experimental.pallas import tpu as pltpu

EPS = 1e-5


# -----------------------------------------------------------------------------
# Fused kernel (channels-first, one program per TB-image batch block)
# -----------------------------------------------------------------------------
def _make_conv_block_kernel(H, W, TB, cin, c1, c2, has_downsample):
    """Build the fused ConvBlock kernel for static shapes."""
    HW = H * W
    L = HW + 2 * W + 2          # flat, row-padded per-image buffer length
    M = TB * HW                 # lane extent of every activation slab
    cout = c1 + 2 * c2

    def bn_relu(v, scale, shift):
        return jnp.maximum(v * scale + shift, 0.0)

    def kernel(*refs):
        if has_downsample:
            (x_ref, s1, b1, w1, s2, b2, w2, s3, b3, w3,
             sd, bd, wd, o_ref, buf_ref, col_ref) = refs
        else:
            (x_ref, s1, b1, w1, s2, b2, w2, s3, b3, w3,
             o_ref, buf_ref, col_ref) = refs

        # Hoisted lane masks marking the (zero) left / right column pads.
        wpos = lax.broadcasted_iota(jnp.int32, (1, HW), 1) % W
        mask_l = wpos != 0        # valid lanes when kernel column dx == 0
        mask_r = wpos != (W - 1)  # valid lanes when kernel column dx == 2

        # Zero the row-pad / guard strips once per program; the convs below only
        # overwrite the interiors, so the strips stay zero across scratch reuse.
        zpad = jnp.zeros((buf_ref.shape[0], W + 1), buf_ref.dtype)
        for tb in range(TB):
            base = tb * L
            buf_ref[:, base:base + W + 1] = zpad             # guard + top pad row
            buf_ref[:, base + W + 1 + HW:base + L] = zpad    # bottom pad row + guard

        def conv3x3(y, w_t, k_in):
            """3x3 'same' conv of y:(k_in, M) f32 with w_t:(k_out, 9*k_in) bf16."""
            y16 = y.astype(jnp.bfloat16)
            for tb in range(TB):
                start = tb * L + W + 1
                buf_ref[0:k_in, start:start + HW] = y16[:, tb * HW:(tb + 1) * HW]
            for dy in range(3):
                for dx in range(3):
                    t = dy * 3 + dx
                    for tb in range(TB):
                        s0 = tb * L + dy * W + dx
                        src = buf_ref[0:k_in, s0:s0 + HW]
                        if dx == 0:
                            src = jnp.where(mask_l, src, jnp.zeros_like(src))
                        elif dx == 2:
                            src = jnp.where(mask_r, src, jnp.zeros_like(src))
                        col_ref[t * k_in:(t + 1) * k_in,
                                tb * HW:(tb + 1) * HW] = src
            return jnp.dot(w_t, col_ref[0:9 * k_in, :],
                           preferred_element_type=jnp.float32)   # (k_out, M) f32

        x = x_ref[...]                                           # (cin, M) f32
        if has_downsample:
            yd = bn_relu(x, sd[...], bd[...]).astype(jnp.bfloat16)
            res = jnp.dot(wd[...], yd, preferred_element_type=jnp.float32)
        else:
            res = x                                              # identity residual

        out1 = conv3x3(bn_relu(x, s1[...], b1[...]), w1[...], cin)     # (c1, M)
        out2 = conv3x3(bn_relu(out1, s2[...], b2[...]), w2[...], c1)   # (c2, M)
        out3 = conv3x3(bn_relu(out2, s3[...], b3[...]), w3[...], c2)   # (c2, M)

        # Channel concat + residual: sublane-offset, lane-dense stores.
        o_ref[0:c1, :] = out1 + res[0:c1, :]
        o_ref[c1:c1 + c2, :] = out2 + res[c1:c1 + c2, :]
        o_ref[c1 + c2:cout, :] = out3 + res[c1 + c2:cout, :]

    return kernel


# -----------------------------------------------------------------------------
# Wrapper: single pallas_call for the whole ConvBlock
# -----------------------------------------------------------------------------
def _pick_batch_block(N, HW, target=256, max_m=1 << 15):
    """Largest-ish batch block TB with N % TB == 0 and a lane-friendly TB*HW."""
    best = None
    for tb in range(1, N + 1):
        if N % tb:
            continue
        m = tb * HW
        if best is not None and m > max_m:
            break
        if m % 128 == 0 or tb == N:
            best = tb
            if m >= target:
                break
    return best if best is not None else N


def conv_block_forward(x, params):
    """Fused ConvBlock forward.  x is NHWC float32; returns NHWC float32."""
    N, H, W, cin = x.shape
    c1 = params["w1"].shape[-1]
    c2 = params["w2"].shape[-1]
    cout = c1 + 2 * c2
    cin_max = max(cin, c1, c2)
    HW = H * W
    TB = _pick_batch_block(N, HW)
    M = TB * HW
    L = HW + 2 * W + 2
    has_ds = params["wd"] is not None

    # Channels-first, spatially-flat activation slab: (Cin, N*H*W).
    x_cf = jnp.transpose(x, (3, 0, 1, 2)).reshape(cin, N * HW)

    # Weights: HWIO -> (Cout, 9*Cin), pre-cast to bf16 here (not per grid step).
    w1t = params["w1"].reshape(9 * cin, c1).T.astype(jnp.bfloat16)
    w2t = params["w2"].reshape(9 * c1, c2).T.astype(jnp.bfloat16)
    w3t = params["w3"].reshape(9 * c2, c2).T.astype(jnp.bfloat16)

    # Folded BN params as (C, 1) columns (broadcast along lanes in-kernel).
    s1 = params["s1"].reshape(cin, 1); b1 = params["b1"].reshape(cin, 1)
    s2 = params["s2"].reshape(c1, 1);  b2 = params["b2"].reshape(c1, 1)
    s3 = params["s3"].reshape(c2, 1);  b3 = params["b3"].reshape(c2, 1)

    args = [x_cf, s1, b1, w1t, s2, b2, w2t, s3, b3, w3t]
    if has_ds:
        sd = params["sd"].reshape(cin, 1); bd = params["bd"].reshape(cin, 1)
        wdt = params["wd"].T.astype(jnp.bfloat16)        # (cout, cin)
        args += [sd, bd, wdt]

    def rep_spec(a):
        shp = a.shape
        return pl.BlockSpec(shp, lambda n, _s=shp: (0,) * len(_s))

    in_specs = [pl.BlockSpec((cin, M), lambda n: (0, n))]
    in_specs += [rep_spec(a) for a in args[1:]]
    out_spec = pl.BlockSpec((cout, M), lambda n: (0, n))

    kernel = _make_conv_block_kernel(H, W, TB, cin, c1, c2, has_ds)

    # Rough cost / VMEM accounting.
    flops = 2 * N * HW * (9 * cin * c1 + 9 * c1 * c2 + 9 * c2 * c2)
    if has_ds:
        flops += 2 * N * HW * cin * cout
    bytes_accessed = 4 * (int(x_cf.size) + N * HW * cout) + sum(
        int(a.size) * a.dtype.itemsize for a in args[1:])

    scratch_bytes = 2 * (cin_max * TB * L + 9 * cin_max * M)     # bf16 scratch
    block_bytes = 4 * M * (cin + cout) * 2                       # double-buffered in/out
    param_bytes = sum(int(a.size) * a.dtype.itemsize for a in args[1:])
    vmem_limit = int(min(max(2 * (scratch_bytes + block_bytes + param_bytes),
                             32 * 1024 * 1024), 64 * 1024 * 1024))

    out_cf = pl.pallas_call(
        kernel,
        out_shape=jax.ShapeDtypeStruct((cout, N * HW), jnp.float32),
        grid=(N // TB,),
        in_specs=in_specs,
        out_specs=out_spec,
        scratch_shapes=[
            pltpu.VMEM((cin_max, TB * L), jnp.bfloat16),   # row-padded activations
            pltpu.VMEM((9 * cin_max, M), jnp.bfloat16),    # im2col matrix (K, M)
        ],
        compiler_params=pltpu.CompilerParams(
            dimension_semantics=("parallel",),
            vmem_limit_bytes=vmem_limit),
        cost_estimate=pl.CostEstimate(flops=flops, transcendentals=0,
                                      bytes_accessed=bytes_accessed),
    )(*args)

    # (Cout, N*H*W) -> NHWC
    return jnp.transpose(out_cf.reshape(cout, N, H, W), (1, 2, 3, 0))


# -----------------------------------------------------------------------------
# Parameter construction (deterministic, synthetic)
# -----------------------------------------------------------------------------
def fold_bn(gamma, beta, mean, var):
    scale = gamma / jnp.sqrt(var + EPS)
    shift = beta - mean * scale
    return scale, shift


def make_bn_params(key, c):
    k1, k2, k3, k4 = jax.random.split(key, 4)
    gamma = 1.0 + 0.1 * jax.random.normal(k1, (c,), jnp.float32)
    beta = 0.1 * jax.random.normal(k2, (c,), jnp.float32)
    mean = 0.1 * jax.random.normal(k3, (c,), jnp.float32)
    var = jnp.abs(jax.random.normal(k4, (c,), jnp.float32)) + 0.5
    return fold_bn(gamma, beta, mean, var)


def make_conv_weight(key, kh, kw, cin, cout):
    return 0.1 * jax.random.normal(key, (kh, kw, cin, cout), jnp.float32)  # HWIO


def init_conv_block(key, in_planes, out_planes):
    c1 = out_planes // 2
    c2 = out_planes // 4
    keys = jax.random.split(key, 8)
    p = {}
    p["s1"], p["b1"] = make_bn_params(keys[0], in_planes)
    p["w1"] = make_conv_weight(keys[1], 3, 3, in_planes, c1)
    p["s2"], p["b2"] = make_bn_params(keys[2], c1)
    p["w2"] = make_conv_weight(keys[3], 3, 3, c1, c2)
    p["s3"], p["b3"] = make_bn_params(keys[4], c2)
    p["w3"] = make_conv_weight(keys[5], 3, 3, c2, c2)
    if in_planes != out_planes:
        p["sd"], p["bd"] = make_bn_params(keys[6], in_planes)
        p["wd"] = make_conv_weight(keys[7], 1, 1, in_planes, out_planes).reshape(
            in_planes, out_planes)
    else:
        p["sd"] = p["bd"] = p["wd"] = None
    return p


# -----------------------------------------------------------------------------
# Pure-JAX reference for verification
# -----------------------------------------------------------------------------
def ref_forward(x, params):
    def bnrelu(v, s, b):
        return jnp.maximum(v * s.reshape(1, 1, 1, -1) + b.reshape(1, 1, 1, -1), 0.0)

    def conv(v, w, pad):
        return lax.conv_general_dilated(
            v, w, window_strides=(1, 1), padding=[(pad, pad), (pad, pad)],
            dimension_numbers=("NHWC", "HWIO", "NHWC"))

    o1 = conv(bnrelu(x, params["s1"], params["b1"]), params["w1"], 1)
    o2 = conv(bnrelu(o1, params["s2"], params["b2"]), params["w2"], 1)
    o3 = conv(bnrelu(o2, params["s3"], params["b3"]), params["w3"], 1)
    cat = jnp.concatenate([o1, o2, o3], axis=-1)
    if params["wd"] is not None:
        res = conv(bnrelu(x, params["sd"], params["bd"]),
                   params["wd"].reshape(1, 1, *params["wd"].shape), 0)
    else:
        res = x
    return cat + res


# -----------------------------------------------------------------------------
if __name__ == "__main__":
    key = jax.random.PRNGKey(0)
    kx, kp = jax.random.split(key)

    N, H, W = 2, 8, 8
    in_planes, out_planes = 16, 32   # conv1: 16->16, conv2: 16->8, conv3: 8->8

    x = jax.random.normal(kx, (N, H, W, in_planes), jnp.float32)  # NHWC
    params = init_conv_block(kp, in_planes, out_planes)

    out = jax.block_until_ready(conv_block_forward(x, params))
    ref = jax.block_until_ready(ref_forward(x, params))

    assert out.shape == (N, H, W, out_planes), out.shape
    max_err = float(jnp.max(jnp.abs(out - ref)))
    # bf16 matmul inputs (f32 accumulation) vs f32 reference -> loose-ish bound
    assert max_err < 5e-2, f"mismatch vs reference, max abs err = {max_err}"

    print("KERNEL_OK")
</pallas_src>

<mosaic_0001>
module attributes {stable_mosaic.version = 11 : i64} {
  func.func @kernel(%arg0: i32, %arg1: memref<16x128xf32, #tpu.memory_space<vmem>>, %arg2: memref<16x1xf32, #tpu.memory_space<vmem>>, %arg3: memref<16x1xf32, #tpu.memory_space<vmem>>, %arg4: memref<16x144xbf16, #tpu.memory_space<vmem>>, %arg5: memref<16x1xf32, #tpu.memory_space<vmem>>, %arg6: memref<16x1xf32, #tpu.memory_space<vmem>>, %arg7: memref<8x144xbf16, #tpu.memory_space<vmem>>, %arg8: memref<8x1xf32, #tpu.memory_space<vmem>>, %arg9: memref<8x1xf32, #tpu.memory_space<vmem>>, %arg10: memref<8x72xbf16, #tpu.memory_space<vmem>>, %arg11: memref<16x1xf32, #tpu.memory_space<vmem>>, %arg12: memref<16x1xf32, #tpu.memory_space<vmem>>, %arg13: memref<32x16xbf16, #tpu.memory_space<vmem>>, %arg14: memref<32x128xf32, #tpu.memory_space<vmem>>, %arg15: memref<16x164xbf16, #tpu.memory_space<vmem>>, %arg16: memref<144x128xbf16, #tpu.memory_space<vmem>>) attributes {dimension_semantics = [#tpu.dimension_semantics<parallel>], iteration_bounds = array<i64: 1>, scalar_prefetch = 0 : i64, scratch_operands = 2 : i64, tpu.core_type = #tpu.core_type<tc>, window_params = [{transform_indices = @transform_0, window_bounds = array<i64: 16, 128>}, {pipeline_mode = #tpu.pipeline_mode<synchronous>, transform_indices = @transform_1, window_bounds = array<i64: 16, 1>}, {pipeline_mode = #tpu.pipeline_mode<synchronous>, transform_indices = @transform_2, window_bounds = array<i64: 16, 1>}, {pipeline_mode = #tpu.pipeline_mode<synchronous>, transform_indices = @transform_3, window_bounds = array<i64: 16, 144>}, {pipeline_mode = #tpu.pipeline_mode<synchronous>, transform_indices = @transform_4, window_bounds = array<i64: 16, 1>}, {pipeline_mode = #tpu.pipeline_mode<synchronous>, transform_indices = @transform_5, window_bounds = array<i64: 16, 1>}, {pipeline_mode = #tpu.pipeline_mode<synchronous>, transform_indices = @transform_6, window_bounds = array<i64: 8, 144>}, {pipeline_mode = #tpu.pipeline_mode<synchronous>, transform_indices = @transform_7, window_bounds = array<i64: 8, 1>}, {pipeline_mode = #tpu.pipeline_mode<synchronous>, transform_indices = @transform_8, window_bounds = array<i64: 8, 1>}, {pipeline_mode = #tpu.pipeline_mode<synchronous>, transform_indices = @transform_9, window_bounds = array<i64: 8, 72>}, {pipeline_mode = #tpu.pipeline_mode<synchronous>, transform_indices = @transform_10, window_bounds = array<i64: 16, 1>}, {pipeline_mode = #tpu.pipeline_mode<synchronous>, transform_indices = @transform_11, window_bounds = array<i64: 16, 1>}, {pipeline_mode = #tpu.pipeline_mode<synchronous>, transform_indices = @transform_12, window_bounds = array<i64: 32, 16>}, {transform_indices = @transform_13, window_bounds = array<i64: 32, 128>}]} {
    %0 = tpu.iota {dimensions = array<i32: 1>} : vector<1x64xi32>
    %c8_i32 = arith.constant 8 : i32
    %c0_i32 = arith.constant 0 : i32
    %1 = arith.cmpi eq, %c8_i32, %c0_i32 : i32
    %c1_i32 = arith.constant 1 : i32
    %2 = arith.select %1, %c1_i32, %c8_i32 : i32
    %3 = vector.broadcast %2 : i32 to vector<1x64xi32>
    %4 = arith.remsi %0, %3 : vector<1x64xi32>
    %c0_i32_0 = arith.constant 0 : i32
    %5 = vector.broadcast %c0_i32_0 : i32 to vector<1x64xi32>
    %6 = arith.cmpi ne, %4, %5 : vector<1x64xi32>
    %c0_i32_1 = arith.constant 0 : i32
    %7 = vector.broadcast %c0_i32_1 : i32 to vector<1x64xi32>
    %8 = arith.cmpi slt, %4, %7 : vector<1x64xi32>
    %c0_i32_2 = arith.constant 0 : i32
    %9 = arith.cmpi slt, %2, %c0_i32_2 : i32
    %10 = vector.broadcast %9 : i1 to vector<1x64xi1>
    %11 = vector.broadcast %10 : vector<1x64xi1> to vector<1x64xi1>
    %12 = arith.xori %8, %11 : vector<1x64xi1>
    %13 = arith.andi %12, %6 : vector<1x64xi1>
    %14 = vector.broadcast %2 : i32 to vector<1x64xi32>
    %15 = arith.addi %4, %14 : vector<1x64xi32>
    %16 = arith.select %13, %15, %4 : vector<1x64xi1>, vector<1x64xi32>
    %c0_i32_3 = arith.constant 0 : i32
    %17 = vector.broadcast %c0_i32_3 : i32 to vector<1x64xi32>
    %18 = arith.cmpi ne, %16, %17 : vector<1x64xi32>
    %c7_i32 = arith.constant 7 : i32
    %19 = vector.broadcast %c7_i32 : i32 to vector<1x64xi32>
    %20 = arith.cmpi ne, %16, %19 : vector<1x64xi32>
    %cst = arith.constant 0.000000e+00 : bf16
    %21 = vector.broadcast %cst : bf16 to vector<16x9xbf16>
    %c0 = arith.constant 0 : index
    %c0_4 = arith.constant 0 : index
    %22 = vector.load %arg15[%c0, %c0_4] : memref<16x164xbf16, #tpu.memory_space<vmem>>, vector<16x9xbf16>
    tpu.vector_store %arg15[%c0, %c0_4], %21 {strides = array<i32>} : memref<16x164xbf16, #tpu.memory_space<vmem>>, vector<16x9xbf16>,
    %c0_5 = arith.constant 0 : index
    %c73 = arith.constant 73 : index
    %23 = vector.load %arg15[%c0_5, %c73] : memref<16x164xbf16, #tpu.memory_space<vmem>>, vector<16x9xbf16>
    tpu.vector_store %arg15[%c0_5, %c73], %21 {strides = array<i32>} : memref<16x164xbf16, #tpu.memory_space<vmem>>, vector<16x9xbf16>,
    %c0_6 = arith.constant 0 : index
    %c82 = arith.constant 82 : index
    %24 = vector.load %arg15[%c0_6, %c82] : memref<16x164xbf16, #tpu.memory_space<vmem>>, vector<16x9xbf16>
    tpu.vector_store %arg15[%c0_6, %c82], %21 {strides = array<i32>} : memref<16x164xbf16, #tpu.memory_space<vmem>>, vector<16x9xbf16>,
    %c0_7 = arith.constant 0 : index
    %c155 = arith.constant 155 : index
    %25 = vector.load %arg15[%c0_7, %c155] : memref<16x164xbf16, #tpu.memory_space<vmem>>, vector<16x9xbf16>
    tpu.vector_store %arg15[%c0_7, %c155], %21 {strides = array<i32>} : memref<16x164xbf16, #tpu.memory_space<vmem>>, vector<16x9xbf16>,
    %c0_8 = arith.constant 0 : index
    %c0_9 = arith.constant 0 : index
    %26 = vector.load %arg1[%c0_8, %c0_9] : memref<16x128xf32, #tpu.memory_space<vmem>>, vector<16x128xf32>
    %c0_10 = arith.constant 0 : index
    %c0_11 = arith.constant 0 : index
    %27 = vector.load %arg11[%c0_10, %c0_11] : memref<16x1xf32, #tpu.memory_space<vmem>>, vector<16x1xf32>
    %c0_12 = arith.constant 0 : index
    %c0_13 = arith.constant 0 : index
    %28 = vector.load %arg12[%c0_12, %c0_13] : memref<16x1xf32, #tpu.memory_space<vmem>>, vector<16x1xf32>
    %29 = vector.broadcast %27 : vector<16x1xf32> to vector<16x128xf32>
    %30 = arith.mulf %26, %29 : vector<16x128xf32>
    %31 = vector.broadcast %28 : vector<16x1xf32> to vector<16x128xf32>
    %32 = arith.addf %30, %31 : vector<16x128xf32>
    %cst_14 = arith.constant 0.000000e+00 : f32
    %33 = vector.broadcast %cst_14 : f32 to vector<16x128xf32>
    %34 = arith.maximumf %32, %33 : vector<16x128xf32>
    %35 = arith.truncf %34 : vector<16x128xf32> to vector<16x128xbf16>
    %c0_15 = arith.constant 0 : index
    %c0_16 = arith.constant 0 : index
    %36 = vector.load %arg13[%c0_15, %c0_16] : memref<32x16xbf16, #tpu.memory_space<vmem>>, vector<32x16xbf16>
    %cst_17 = arith.constant dense<0.000000e+00> : vector<32x128xf32>
    %37 = tpu.matmul %36, %35, %cst_17 {dimension_numbers = #tpu.dot_dimension_numbers<[1], [0], [0], [1], [0, 0, 1, 1], [], []>} : vector<32x16xbf16>, vector<16x128xbf16>, vector<32x128xf32> -> vector<32x128xf32>
    %c0_18 = arith.constant 0 : index
    %c0_19 = arith.constant 0 : index
    %38 = vector.load %arg2[%c0_18, %c0_19] : memref<16x1xf32, #tpu.memory_space<vmem>>, vector<16x1xf32>
    %c0_20 = arith.constant 0 : index
    %c0_21 = arith.constant 0 : index
    %39 = vector.load %arg3[%c0_20, %c0_21] : memref<16x1xf32, #tpu.memory_space<vmem>>, vector<16x1xf32>
    %40 = vector.broadcast %38 : vector<16x1xf32> to vector<16x128xf32>
    %41 = arith.mulf %26, %40 : vector<16x128xf32>
    %42 = vector.broadcast %39 : vector<16x1xf32> to vector<16x128xf32>
    %43 = arith.addf %41, %42 : vector<16x128xf32>
    %cst_22 = arith.constant 0.000000e+00 : f32
    %44 = vector.broadcast %cst_22 : f32 to vector<16x128xf32>
    %45 = arith.maximumf %43, %44 : vector<16x128xf32>
    %c0_23 = arith.constant 0 : index
    %c0_24 = arith.constant 0 : index
    %46 = vector.load %arg4[%c0_23, %c0_24] : memref<16x144xbf16, #tpu.memory_space<vmem>>, vector<16x144xbf16>
    %47 = arith.truncf %45 : vector<16x128xf32> to vector<16x128xbf16>
    %48 = vector.extract_strided_slice %47 {offsets = [0, 0], sizes = [16, 64], strides = [1, 1]} : vector<16x128xbf16> to vector<16x64xbf16>
    %c0_25 = arith.constant 0 : index
    %c9 = arith.constant 9 : index
    %49 = vector.load %arg15[%c0_25, %c9] : memref<16x164xbf16, #tpu.memory_space<vmem>>, vector<16x64xbf16>
    tpu.vector_store %arg15[%c0_25, %c9], %48 {strides = array<i32>} : memref<16x164xbf16, #tpu.memory_space<vmem>>, vector<16x64xbf16>,
    %50 = vector.extract_strided_slice %47 {offsets = [0, 64], sizes = [16, 64], strides = [1, 1]} : vector<16x128xbf16> to vector<16x64xbf16>
    %c0_26 = arith.constant 0 : index
    %c91 = arith.constant 91 : index
    %51 = vector.load %arg15[%c0_26, %c91] : memref<16x164xbf16, #tpu.memory_space<vmem>>, vector<16x64xbf16>
    tpu.vector_store %arg15[%c0_26, %c91], %50 {strides = array<i32>} : memref<16x164xbf16, #tpu.memory_space<vmem>>, vector<16x64xbf16>,
    %c0_27 = arith.constant 0 : index
    %c0_28 = arith.constant 0 : index
    %52 = vector.load %arg15[%c0_27, %c0_28] : memref<16x164xbf16, #tpu.memory_space<vmem>>, vector<16x64xbf16>
    %cst_29 = arith.constant 0.000000e+00 : bf16
    %53 = vector.broadcast %cst_29 : bf16 to vector<16x64xbf16>
    %54 = vector.shape_cast %18 : vector<1x64xi1> to vector<1x64xi1>
    %55 = vector.broadcast %54 : vector<1x64xi1> to vector<16x64xi1>
    %56 = arith.select %55, %52, %53 : vector<16x64xi1>, vector<16x64xbf16>
    %c0_30 = arith.constant 0 : index
    %c0_31 = arith.constant 0 : index
    %57 = vector.load %arg16[%c0_30, %c0_31] : memref<144x128xbf16, #tpu.memory_space<vmem>>, vector<16x64xbf16>
    tpu.vector_store %arg16[%c0_30, %c0_31], %56 {strides = array<i32>} : memref<144x128xbf16, #tpu.memory_space<vmem>>, vector<16x64xbf16>,
    %c0_32 = arith.constant 0 : index
    %c82_33 = arith.constant 82 : index
    %58 = vector.load %arg15[%c0_32, %c82_33] : memref<16x164xbf16, #tpu.memory_space<vmem>>, vector<16x64xbf16>
    %cst_34 = arith.constant 0.000000e+00 : bf16
    %59 = vector.broadcast %cst_34 : bf16 to vector<16x64xbf16>
    %60 = vector.shape_cast %18 : vector<1x64xi1> to vector<1x64xi1>
    %61 = vector.broadcast %60 : vector<1x64xi1> to vector<16x64xi1>
    %62 = arith.select %61, %58, %59 : vector<16x64xi1>, vector<16x64xbf16>
    %c0_35 = arith.constant 0 : index
    %c64 = arith.constant 64 : index
    %63 = vector.load %arg16[%c0_35, %c64] : memref<144x128xbf16, #tpu.memory_space<vmem>>, vector<16x64xbf16>
    tpu.vector_store %arg16[%c0_35, %c64], %62 {strides = array<i32>} : memref<144x128xbf16, #tpu.memory_space<vmem>>, vector<16x64xbf16>,
    %c0_36 = arith.constant 0 : index
    %c1 = arith.constant 1 : index
    %64 = vector.load %arg15[%c0_36, %c1] : memref<16x164xbf16, #tpu.memory_space<vmem>>, vector<16x64xbf16>
    %c16 = arith.constant 16 : index
    %c0_37 = arith.constant 0 : index
    %65 = vector.load %arg16[%c16, %c0_37] : memref<144x128xbf16, #tpu.memory_space<vmem>>, vector<16x64xbf16>
    tpu.vector_store %arg16[%c16, %c0_37], %64 {strides = array<i32>} : memref<144x128xbf16, #tpu.memory_space<vmem>>, vector<16x64xbf16>,
    %c0_38 = arith.constant 0 : index
    %c83 = arith.constant 83 : index
    %66 = vector.load %arg15[%c0_38, %c83] : memref<16x164xbf16, #tpu.memory_space<vmem>>, vector<16x64xbf16>
    %c16_39 = arith.constant 16 : index
    %c64_40 = arith.constant 64 : index
    %67 = vector.load %arg16[%c16_39, %c64_40] : memref<144x128xbf16, #tpu.memory_space<vmem>>, vector<16x64xbf16>
    tpu.vector_store %arg16[%c16_39, %c64_40], %66 {strides = array<i32>} : memref<144x128xbf16, #tpu.memory_space<vmem>>, vector<16x64xbf16>,
    %c0_41 = arith.constant 0 : index
    %c2 = arith.constant 2 : index
    %68 = vector.load %arg15[%c0_41, %c2] : memref<16x164xbf16, #tpu.memory_space<vmem>>, vector<16x64xbf16>
    %cst_42 = arith.constant 0.000000e+00 : bf16
    %69 = vector.broadcast %cst_42 : bf16 to vector<16x64xbf16>
    %70 = vector.shape_cast %20 : vector<1x64xi1> to vector<1x64xi1>
    %71 = vector.broadcast %70 : vector<1x64xi1> to vector<16x64xi1>
    %72 = arith.select %71, %68, %69 : vector<16x64xi1>, vector<16x64xbf16>
    %c32 = arith.constant 32 : index
    %c0_43 = arith.constant 0 : index
    %73 = vector.load %arg16[%c32, %c0_43] : memref<144x128xbf16, #tpu.memory_space<vmem>>, vector<16x64xbf16>
    tpu.vector_store %arg16[%c32, %c0_43], %72 {strides = array<i32>} : memref<144x128xbf16, #tpu.memory_space<vmem>>, vector<16x64xbf16>,
    %c0_44 = arith.constant 0 : index
    %c84 = arith.constant 84 : index
    %74 = vector.load %arg15[%c0_44, %c84] : memref<16x164xbf16, #tpu.memory_space<vmem>>, vector<16x64xbf16>
    %cst_45 = arith.constant 0.000000e+00 : bf16
    %75 = vector.broadcast %cst_45 : bf16 to vector<16x64xbf16>
    %76 = vector.shape_cast %20 : vector<1x64xi1> to vector<1x64xi1>
    %77 = vector.broadcast %76 : vector<1x64xi1> to vector<16x64xi1>
    %78 = arith.select %77, %74, %75 : vector<16x64xi1>, vector<16x64xbf16>
    %c32_46 = arith.constant 32 : index
    %c64_47 = arith.constant 64 : index
    %79 = vector.load %arg16[%c32_46, %c64_47] : memref<144x128xbf16, #tpu.memory_space<vmem>>, vector<16x64xbf16>
    tpu.vector_store %arg16[%c32_46, %c64_47], %78 {strides = array<i32>} : memref<144x128xbf16, #tpu.memory_space<vmem>>, vector<16x64xbf16>,
    %c0_48 = arith.constant 0 : index
    %c8 = arith.constant 8 : index
    %80 = vector.load %arg15[%c0_48, %c8] : memref<16x164xbf16, #tpu.memory_space<vmem>>, vector<16x64xbf16>
    %cst_49 = arith.constant 0.000000e+00 : bf16
    %81 = vector.broadcast %cst_49 : bf16 to vector<16x64xbf16>
    %82 = vector.shape_cast %18 : vector<1x64xi1> to vector<1x64xi1>
    %83 = vector.broadcast %82 : vector<1x64xi1> to vector<16x64xi1>
    %84 = arith.select %83, %80, %81 : vector<16x64xi1>, vector<16x64xbf16>
    %c48 = arith.constant 48 : index
    %c0_50 = arith.constant 0 : index
    %85 = vector.load %arg16[%c48, %c0_50] : memref<144x128xbf16, #tpu.memory_space<vmem>>, vector<16x64xbf16>
    tpu.vector_store %arg16[%c48, %c0_50], %84 {strides = array<i32>} : memref<144x128xbf16, #tpu.memory_space<vmem>>, vector<16x64xbf16>,
    %c0_51 = arith.constant 0 : index
    %c90 = arith.constant 90 : index
    %86 = vector.load %arg15[%c0_51, %c90] : memref<16x164xbf16, #tpu.memory_space<vmem>>, vector<16x64xbf16>
    %cst_52 = arith.constant 0.000000e+00 : bf16
    %87 = vector.broadcast %cst_52 : bf16 to vector<16x64xbf16>
    %88 = vector.shape_cast %18 : vector<1x64xi1> to vector<1x64xi1>
    %89 = vector.broadcast %88 : vector<1x64xi1> to vector<16x64xi1>
    %90 = arith.select %89, %86, %87 : vector<16x64xi1>, vector<16x64xbf16>
    %c48_53 = arith.constant 48 : index
    %c64_54 = arith.constant 64 : index
    %91 = vector.load %arg16[%c48_53, %c64_54] : memref<144x128xbf16, #tpu.memory_space<vmem>>, vector<16x64xbf16>
    tpu.vector_store %arg16[%c48_53, %c64_54], %90 {strides = array<i32>} : memref<144x128xbf16, #tpu.memory_space<vmem>>, vector<16x64xbf16>,
    %c0_55 = arith.constant 0 : index
    %c9_56 = arith.constant 9 : index
    %92 = vector.load %arg15[%c0_55, %c9_56] : memref<16x164xbf16, #tpu.memory_space<vmem>>, vector<16x64xbf16>
    %c64_57 = arith.constant 64 : index
    %c0_58 = arith.constant 0 : index
    %93 = vector.load %arg16[%c64_57, %c0_58] : memref<144x128xbf16, #tpu.memory_space<vmem>>, vector<16x64xbf16>
    tpu.vector_store %arg16[%c64_57, %c0_58], %92 {strides = array<i32>} : memref<144x128xbf16, #tpu.memory_space<vmem>>, vector<16x64xbf16>,
    %c0_59 = arith.constant 0 : index
    %c91_60 = arith.constant 91 : index
    %94 = vector.load %arg15[%c0_59, %c91_60] : memref<16x164xbf16, #tpu.memory_space<vmem>>, vector<16x64xbf16>
    %c64_61 = arith.constant 64 : index
    %c64_62 = arith.constant 64 : index
    %95 = vector.load %arg16[%c64_61, %c64_62] : memref<144x128xbf16, #tpu.memory_space<vmem>>, vector<16x64xbf16>
    tpu.vector_store %arg16[%c64_61, %c64_62], %94 {strides = array<i32>} : memref<144x128xbf16, #tpu.memory_space<vmem>>, vector<16x64xbf16>,
    %c0_63 = arith.constant 0 : index
    %c10 = arith.constant 10 : index
    %96 = vector.load %arg15[%c0_63, %c10] : memref<16x164xbf16, #tpu.memory_space<vmem>>, vector<16x64xbf16>
    %cst_64 = arith.constant 0.000000e+00 : bf16
    %97 = vector.broadcast %cst_64 : bf16 to vector<16x64xbf16>
    %98 = vector.shape_cast %20 : vector<1x64xi1> to vector<1x64xi1>
    %99 = vector.broadcast %98 : vector<1x64xi1> to vector<16x64xi1>
    %100 = arith.select %99, %96, %97 : vector<16x64xi1>, vector<16x64xbf16>
    %c80 = arith.constant 80 : index
    %c0_65 = arith.constant 0 : index
    %101 = vector.load %arg16[%c80, %c0_65] : memref<144x128xbf16, #tpu.memory_space<vmem>>, vector<16x64xbf16>
    tpu.vector_store %arg16[%c80, %c0_65], %100 {strides = array<i32>} : memref<144x128xbf16, #tpu.memory_space<vmem>>, vector<16x64xbf16>,
    %c0_66 = arith.constant 0 : index
    %c92 = arith.constant 92 : index
    %102 = vector.load %arg15[%c0_66, %c92] : memref<16x164xbf16, #tpu.memory_space<vmem>>, vector<16x64xbf16>
    %cst_67 = arith.constant 0.000000e+00 : bf16
    %103 = vector.broadcast %cst_67 : bf16 to vector<16x64xbf16>
    %104 = vector.shape_cast %20 : vector<1x64xi1> to vector<1x64xi1>
    %105 = vector.broadcast %104 : vector<1x64xi1> to vector<16x64xi1>
    %106 = arith.select %105, %102, %103 : vector<16x64xi1>, vector<16x64xbf16>
    %c80_68 = arith.constant 80 : index
    %c64_69 = arith.constant 64 : index
    %107 = vector.load %arg16[%c80_68, %c64_69] : memref<144x128xbf16, #tpu.memory_space<vmem>>, vector<16x64xbf16>
    tpu.vector_store %arg16[%c80_68, %c64_69], %106 {strides = array<i32>} : memref<144x128xbf16, #tpu.memory_space<vmem>>, vector<16x64xbf16>,
    %c0_70 = arith.constant 0 : index
    %c16_71 = arith.constant 16 : index
    %108 = vector.load %arg15[%c0_70, %c16_71] : memref<16x164xbf16, #tpu.memory_space<vmem>>, vector<16x64xbf16>
    %cst_72 = arith.constant 0.000000e+00 : bf16
    %109 = vector.broadcast %cst_72 : bf16 to vector<16x64xbf16>
    %110 = vector.shape_cast %18 : vector<1x64xi1> to vector<1x64xi1>
    %111 = vector.broadcast %110 : vector<1x64xi1> to vector<16x64xi1>
    %112 = arith.select %111, %108, %109 : vector<16x64xi1>, vector<16x64xbf16>
    %c96 = arith.constant 96 : index
    %c0_73 = arith.constant 0 : index
    %113 = vector.load %arg16[%c96, %c0_73] : memref<144x128xbf16, #tpu.memory_space<vmem>>, vector<16x64xbf16>
    tpu.vector_store %arg16[%c96, %c0_73], %112 {strides = array<i32>} : memref<144x128xbf16, #tpu.memory_space<vmem>>, vector<16x64xbf16>,
    %c0_74 = arith.constant 0 : index
    %c98 = arith.constant 98 : index
    %114 = vector.load %arg15[%c0_74, %c98] : memref<16x164xbf16, #tpu.memory_space<vmem>>, vector<16x64xbf16>
    %cst_75 = arith.constant 0.000000e+00 : bf16
    %115 = vector.broadcast %cst_75 : bf16 to vector<16x64xbf16>
    %116 = vector.shape_cast %18 : vector<1x64xi1> to vector<1x64xi1>
    %117 = vector.broadcast %116 : vector<1x64xi1> to vector<16x64xi1>
    %118 = arith.select %117, %114, %115 : vector<16x64xi1>, vector<16x64xbf16>
    %c96_76 = arith.constant 96 : index
    %c64_77 = arith.constant 64 : index
    %119 = vector.load %arg16[%c96_76, %c64_77] : memref<144x128xbf16, #tpu.memory_space<vmem>>, vector<16x64xbf16>
    tpu.vector_store %arg16[%c96_76, %c64_77], %118 {strides = array<i32>} : memref<144x128xbf16, #tpu.memory_space<vmem>>, vector<16x64xbf16>,
    %c0_78 = arith.constant 0 : index
    %c17 = arith.constant 17 : index
    %120 = vector.load %arg15[%c0_78, %c17] : memref<16x164xbf16, #tpu.memory_space<vmem>>, vector<16x64xbf16>
    %c112 = arith.constant 112 : index
    %c0_79 = arith.constant 0 : index
    %121 = vector.load %arg16[%c112, %c0_79] : memref<144x128xbf16, #tpu.memory_space<vmem>>, vector<16x64xbf16>
    tpu.vector_store %arg16[%c112, %c0_79], %120 {strides = array<i32>} : memref<144x128xbf16, #tpu.memory_space<vmem>>, vector<16x64xbf16>,
    %c0_80 = arith.constant 0 : index
    %c99 = arith.constant 99 : index
    %122 = vector.load %arg15[%c0_80, %c99] : memref<16x164xbf16, #tpu.memory_space<vmem>>, vector<16x64xbf16>
    %c112_81 = arith.constant 112 : index
    %c64_82 = arith.constant 64 : index
    %123 = vector.load %arg16[%c112_81, %c64_82] : memref<144x128xbf16, #tpu.memory_space<vmem>>, vector<16x64xbf16>
    tpu.vector_store %arg16[%c112_81, %c64_82], %122 {strides = array<i32>} : memref<144x128xbf16, #tpu.memory_space<vmem>>, vector<16x64xbf16>,
    %c0_83 = arith.constant 0 : index
    %c18 = arith.constant 18 : index
    %124 = vector.load %arg15[%c0_83, %c18] : memref<16x164xbf16, #tpu.memory_space<vmem>>, vector<16x64xbf16>
    %cst_84 = arith.constant 0.000000e+00 : bf16
    %125 = vector.broadcast %cst_84 : bf16 to vector<16x64xbf16>
    %126 = vector.shape_cast %20 : vector<1x64xi1> to vector<1x64xi1>
    %127 = vector.broadcast %126 : vector<1x64xi1> to vector<16x64xi1>
    %128 = arith.select %127, %124, %125 : vector<16x64xi1>, vector<16x64xbf16>
    %c128 = arith.constant 128 : index
    %c0_85 = arith.constant 0 : index
    %129 = vector.load %arg16[%c128, %c0_85] : memref<144x128xbf16, #tpu.memory_space<vmem>>, vector<16x64xbf16>
    tpu.vector_store %arg16[%c128, %c0_85], %128 {strides = array<i32>} : memref<144x128xbf16, #tpu.memory_space<vmem>>, vector<16x64xbf16>,
    %c0_86 = arith.constant 0 : index
    %c100 = arith.constant 100 : index
    %130 = vector.load %arg15[%c0_86, %c100] : memref<16x164xbf16, #tpu.memory_space<vmem>>, vector<16x64xbf16>
    %cst_87 = arith.constant 0.000000e+00 : bf16
    %131 = vector.broadcast %cst_87 : bf16 to vector<16x64xbf16>
    %132 = vector.shape_cast %20 : vector<1x64xi1> to vector<1x64xi1>
    %133 = vector.broadcast %132 : vector<1x64xi1> to vector<16x64xi1>
    %134 = arith.select %133, %130, %131 : vector<16x64xi1>, vector<16x64xbf16>
    %c128_88 = arith.constant 128 : index
    %c64_89 = arith.constant 64 : index
    %135 = vector.load %arg16[%c128_88, %c64_89] : memref<144x128xbf16, #tpu.memory_space<vmem>>, vector<16x64xbf16>
    tpu.vector_store %arg16[%c128_88, %c64_89], %134 {strides = array<i32>} : memref<144x128xbf16, #tpu.memory_space<vmem>>, vector<16x64xbf16>,
    %c0_90 = arith.constant 0 : index
    %c0_91 = arith.constant 0 : index
    %136 = vector.load %arg16[%c0_90, %c0_91] : memref<144x128xbf16, #tpu.memory_space<vmem>>, vector<144x128xbf16>
    %cst_92 = arith.constant dense<0.000000e+00> : vector<16x128xf32>
    %137 = tpu.matmul %46, %136, %cst_92 {dimension_numbers = #tpu.dot_dimension_numbers<[1], [0], [0], [1], [0, 0, 1, 1], [], []>} : vector<16x144xbf16>, vector<144x128xbf16>, vector<16x128xf32> -> vector<16x128xf32>
    %c0_93 = arith.constant 0 : index
    %c0_94 = arith.constant 0 : index
    %138 = vector.load %arg5[%c0_93, %c0_94] : memref<16x1xf32, #tpu.memory_space<vmem>>, vector<16x1xf32>
    %c0_95 = arith.constant 0 : index
    %c0_96 = arith.constant 0 : index
    %139 = vector.load %arg6[%c0_95, %c0_96] : memref<16x1xf32, #tpu.memory_space<vmem>>, vector<16x1xf32>
    %140 = vector.broadcast %138 : vector<16x1xf32> to vector<16x128xf32>
    %141 = arith.mulf %137, %140 : vector<16x128xf32>
    %142 = vector.broadcast %139 : vector<16x1xf32> to vector<16x128xf32>
    %143 = arith.addf %141, %142 : vector<16x128xf32>
    %cst_97 = arith.constant 0.000000e+00 : f32
    %144 = vector.broadcast %cst_97 : f32 to vector<16x128xf32>
    %145 = arith.maximumf %143, %144 : vector<16x128xf32>
    %c0_98 = arith.constant 0 : index
    %c0_99 = arith.constant 0 : index
    %146 = vector.load %arg7[%c0_98, %c0_99] : memref<8x144xbf16, #tpu.memory_space<vmem>>, vector<8x144xbf16>
    %147 = arith.truncf %145 : vector<16x128xf32> to vector<16x128xbf16>
    %148 = vector.extract_strided_slice %147 {offsets = [0, 0], sizes = [16, 64], strides = [1, 1]} : vector<16x128xbf16> to vector<16x64xbf16>
    %c0_100 = arith.constant 0 : index
    %c9_101 = arith.constant 9 : index
    %149 = vector.load %arg15[%c0_100, %c9_101] : memref<16x164xbf16, #tpu.memory_space<vmem>>, vector<16x64xbf16>
    tpu.vector_store %arg15[%c0_100, %c9_101], %148 {strides = array<i32>} : memref<16x164xbf16, #tpu.memory_space<vmem>>, vector<16x64xbf16>,
    %150 = vector.extract_strided_slice %147 {offsets = [0, 64], sizes = [16, 64], strides = [1, 1]} : vector<16x128xbf16> to vector<16x64xbf16>
    %c0_102 = arith.constant 0 : index
    %c91_103 = arith.constant 91 : index
    %151 = vector.load %arg15[%c0_102, %c91_103] : memref<16x164xbf16, #tpu.memory_space<vmem>>, vector<16x64xbf16>
    tpu.vector_store %arg15[%c0_102, %c91_103], %150 {strides = array<i32>} : memref<16x164xbf16, #tpu.memory_space<vmem>>, vector<16x64xbf16>,
    %c0_104 = arith.constant 0 : index
    %c0_105 = arith.constant 0 : index
    %152 = vector.load %arg15[%c0_104, %c0_105] : memref<16x164xbf16, #tpu.memory_space<vmem>>, vector<16x64xbf16>
    %cst_106 = arith.constant 0.000000e+00 : bf16
    %153 = vector.broadcast %cst_106 : bf16 to vector<16x64xbf16>
    %154 = vector.shape_cast %18 : vector<1x64xi1> to vector<1x64xi1>
    %155 = vector.broadcast %154 : vector<1x64xi1> to vector<16x64xi1>
    %156 = arith.select %155, %152, %153 : vector<16x64xi1>, vector<16x64xbf16>
    %c0_107 = arith.constant 0 : index
    %c0_108 = arith.constant 0 : index
    %157 = vector.load %arg16[%c0_107, %c0_108] : memref<144x128xbf16, #tpu.memory_space<vmem>>, vector<16x64xbf16>
    tpu.vector_store %arg16[%c0_107, %c0_108], %156 {strides = array<i32>} : memref<144x128xbf16, #tpu.memory_space<vmem>>, vector<16x64xbf16>,
    %c0_109 = arith.constant 0 : index
    %c82_110 = arith.constant 82 : index
    %158 = vector.load %arg15[%c0_109, %c82_110] : memref<16x164xbf16, #tpu.memory_space<vmem>>, vector<16x64xbf16>
    %cst_111 = arith.constant 0.000000e+00 : bf16
    %159 = vector.broadcast %cst_111 : bf16 to vector<16x64xbf16>
    %160 = vector.shape_cast %18 : vector<1x64xi1> to vector<1x64xi1>
    %161 = vector.broadcast %160 : vector<1x64xi1> to vector<16x64xi1>
    %162 = arith.select %161, %158, %159 : vector<16x64xi1>, vector<16x64xbf16>
    %c0_112 = arith.constant 0 : index
    %c64_113 = arith.constant 64 : index
    %163 = vector.load %arg16[%c0_112, %c64_113] : memref<144x128xbf16, #tpu.memory_space<vmem>>, vector<16x64xbf16>
    tpu.vector_store %arg16[%c0_112, %c64_113], %162 {strides = array<i32>} : memref<144x128xbf16, #tpu.memory_space<vmem>>, vector<16x64xbf16>,
    %c0_114 = arith.constant 0 : index
    %c1_115 = arith.constant 1 : index
    %164 = vector.load %arg15[%c0_114, %c1_115] : memref<16x164xbf16, #tpu.memory_space<vmem>>, vector<16x64xbf16>
    %c16_116 = arith.constant 16 : index
    %c0_117 = arith.constant 0 : index
    %165 = vector.load %arg16[%c16_116, %c0_117] : memref<144x128xbf16, #tpu.memory_space<vmem>>, vector<16x64xbf16>
    tpu.vector_store %arg16[%c16_116, %c0_117], %164 {strides = array<i32>} : memref<144x128xbf16, #tpu.memory_space<vmem>>, vector<16x64xbf16>,
    %c0_118 = arith.constant 0 : index
    %c83_119 = arith.constant 83 : index
    %166 = vector.load %arg15[%c0_118, %c83_119] : memref<16x164xbf16, #tpu.memory_space<vmem>>, vector<16x64xbf16>
    %c16_120 = arith.constant 16 : index
    %c64_121 = arith.constant 64 : index
    %167 = vector.load %arg16[%c16_120, %c64_121] : memref<144x128xbf16, #tpu.memory_space<vmem>>, vector<16x64xbf16>
    tpu.vector_store %arg16[%c16_120, %c64_121], %166 {strides = array<i32>} : memref<144x128xbf16, #tpu.memory_space<vmem>>, vector<16x64xbf16>,
    %c0_122 = arith.constant 0 : index
    %c2_123 = arith.constant 2 : index
    %168 = vector.load %arg15[%c0_122, %c2_123] : memref<16x164xbf16, #tpu.memory_space<vmem>>, vector<16x64xbf16>
    %cst_124 = arith.constant 0.000000e+00 : bf16
    %169 = vector.broadcast %cst_124 : bf16 to vector<16x64xbf16>
    %170 = vector.shape_cast %20 : vector<1x64xi1> to vector<1x64xi1>
    %171 = vector.broadcast %170 : vector<1x64xi1> to vector<16x64xi1>
    %172 = arith.select %171, %168, %169 : vector<16x64xi1>, vector<16x64xbf16>
    %c32_125 = arith.constant 32 : index
    %c0_126 = arith.constant 0 : index
    %173 = vector.load %arg16[%c32_125, %c0_126] : memref<144x128xbf16, #tpu.memory_space<vmem>>, vector<16x64xbf16>
    tpu.vector_store %arg16[%c32_125, %c0_126], %172 {strides = array<i32>} : memref<144x128xbf16, #tpu.memory_space<vmem>>, vector<16x64xbf16>,
    %c0_127 = arith.constant 0 : index
    %c84_128 = arith.constant 84 : index
    %174 = vector.load %arg15[%c0_127, %c84_128] : memref<16x164xbf16, #tpu.memory_space<vmem>>, vector<16x64xbf16>
    %cst_129 = arith.constant 0.000000e+00 : bf16
    %175 = vector.broadcast %cst_129 : bf16 to vector<16x64xbf16>
    %176 = vector.shape_cast %20 : vector<1x64xi1> to vector<1x64xi1>
    %177 = vector.broadcast %176 : vector<1x64xi1> to vector<16x64xi1>
    %178 = arith.select %177, %174, %175 : vector<16x64xi1>, vector<16x64xbf16>
    %c32_130 = arith.constant 32 : index
    %c64_131 = arith.constant 64 : index
    %179 = vector.load %arg16[%c32_130, %c64_131] : memref<144x128xbf16, #tpu.memory_space<vmem>>, vector<16x64xbf16>
    tpu.vector_store %arg16[%c32_130, %c64_131], %178 {strides = array<i32>} : memref<144x128xbf16, #tpu.memory_space<vmem>>, vector<16x64xbf16>,
    %c0_132 = arith.constant 0 : index
    %c8_133 = arith.constant 8 : index
    %180 = vector.load %arg15[%c0_132, %c8_133] : memref<16x164xbf16, #tpu.memory_space<vmem>>, vector<16x64xbf16>
    %cst_134 = arith.constant 0.000000e+00 : bf16
    %181 = vector.broadcast %cst_134 : bf16 to vector<16x64xbf16>
    %182 = vector.shape_cast %18 : vector<1x64xi1> to vector<1x64xi1>
    %183 = vector.broadcast %182 : vector<1x64xi1> to vector<16x64xi1>
    %184 = arith.select %183, %180, %181 : vector<16x64xi1>, vector<16x64xbf16>
    %c48_135 = arith.constant 48 : index
    %c0_136 = arith.constant 0 : index
    %185 = vector.load %arg16[%c48_135, %c0_136] : memref<144x128xbf16, #tpu.memory_space<vmem>>, vector<16x64xbf16>
    tpu.vector_store %arg16[%c48_135, %c0_136], %184 {strides = array<i32>} : memref<144x128xbf16, #tpu.memory_space<vmem>>, vector<16x64xbf16>,
    %c0_137 = arith.constant 0 : index
    %c90_138 = arith.constant 90 : index
    %186 = vector.load %arg15[%c0_137, %c90_138] : memref<16x164xbf16, #tpu.memory_space<vmem>>, vector<16x64xbf16>
    %cst_139 = arith.constant 0.000000e+00 : bf16
    %187 = vector.broadcast %cst_139 : bf16 to vector<16x64xbf16>
    %188 = vector.shape_cast %18 : vector<1x64xi1> to vector<1x64xi1>
    %189 = vector.broadcast %188 : vector<1x64xi1> to vector<16x64xi1>
    %190 = arith.select %189, %186, %187 : vector<16x64xi1>, vector<16x64xbf16>
    %c48_140 = arith.constant 48 : index
    %c64_141 = arith.constant 64 : index
    %191 = vector.load %arg16[%c48_140, %c64_141] : memref<144x128xbf16, #tpu.memory_space<vmem>>, vector<16x64xbf16>
    tpu.vector_store %arg16[%c48_140, %c64_141], %190 {strides = array<i32>} : memref<144x128xbf16, #tpu.memory_space<vmem>>, vector<16x64xbf16>,
    %c0_142 = arith.constant 0 : index
    %c9_143 = arith.constant 9 : index
    %192 = vector.load %arg15[%c0_142, %c9_143] : memref<16x164xbf16, #tpu.memory_space<vmem>>, vector<16x64xbf16>
    %c64_144 = arith.constant 64 : index
    %c0_145 = arith.constant 0 : index
    %193 = vector.load %arg16[%c64_144, %c0_145] : memref<144x128xbf16, #tpu.memory_space<vmem>>, vector<16x64xbf16>
    tpu.vector_store %arg16[%c64_144, %c0_145], %192 {strides = array<i32>} : memref<144x128xbf16, #tpu.memory_space<vmem>>, vector<16x64xbf16>,
    %c0_146 = arith.constant 0 : index
    %c91_147 = arith.constant 91 : index
    %194 = vector.load %arg15[%c0_146, %c91_147] : memref<16x164xbf16, #tpu.memory_space<vmem>>, vector<16x64xbf16>
    %c64_148 = arith.constant 64 : index
    %c64_149 = arith.constant 64 : index
    %195 = vector.load %arg16[%c64_148, %c64_149] : memref<144x128xbf16, #tpu.memory_space<vmem>>, vector<16x64xbf16>
    tpu.vector_store %arg16[%c64_148, %c64_149], %194 {strides = array<i32>} : memref<144x128xbf16, #tpu.memory_space<vmem>>, vector<16x64xbf16>,
    %c0_150 = arith.constant 0 : index
    %c10_151 = arith.constant 10 : index
    %196 = vector.load %arg15[%c0_150, %c10_151] : memref<16x164xbf16, #tpu.memory_space<vmem>>, vector<16x64xbf16>
    %cst_152 = arith.constant 0.000000e+00 : bf16
    %197 = vector.broadcast %cst_152 : bf16 to vector<16x64xbf16>
    %198 = vector.shape_cast %20 : vector<1x64xi1> to vector<1x64xi1>
    %199 = vector.broadcast %198 : vector<1x64xi1> to vector<16x64xi1>
    %200 = arith.select %199, %196, %197 : vector<16x64xi1>, vector<16x64xbf16>
    %c80_153 = arith.constant 80 : index
    %c0_154 = arith.constant 0 : index
    %201 = vector.load %arg16[%c80_153, %c0_154] : memref<144x128xbf16, #tpu.memory_space<vmem>>, vector<16x64xbf16>
    tpu.vector_store %arg16[%c80_153, %c0_154], %200 {strides = array<i32>} : memref<144x128xbf16, #tpu.memory_space<vmem>>, vector<16x64xbf16>,
    %c0_155 = arith.constant 0 : index
    %c92_156 = arith.constant 92 : index
    %202 = vector.load %arg15[%c0_155, %c92_156] : memref<16x164xbf16, #tpu.memory_space<vmem>>, vector<16x64xbf16>
    %cst_157 = arith.constant 0.000000e+00 : bf16
    %203 = vector.broadcast %cst_157 : bf16 to vector<16x64xbf16>
    %204 = vector.shape_cast %20 : vector<1x64xi1> to vector<1x64xi1>
    %205 = vector.broadcast %204 : vector<1x64xi1> to vector<16x64xi1>
    %206 = arith.select %205, %202, %203 : vector<16x64xi1>, vector<16x64xbf16>
    %c80_158 = arith.constant 80 : index
    %c64_159 = arith.constant 64 : index
    %207 = vector.load %arg16[%c80_158, %c64_159] : memref<144x128xbf16, #tpu.memory_space<vmem>>, vector<16x64xbf16>
    tpu.vector_store %arg16[%c80_158, %c64_159], %206 {strides = array<i32>} : memref<144x128xbf16, #tpu.memory_space<vmem>>, vector<16x64xbf16>,
    %c0_160 = arith.constant 0 : index
    %c16_161 = arith.constant 16 : index
    %208 = vector.load %arg15[%c0_160, %c16_161] : memref<16x164xbf16, #tpu.memory_space<vmem>>, vector<16x64xbf16>
    %cst_162 = arith.constant 0.000000e+00 : bf16
    %209 = vector.broadcast %cst_162 : bf16 to vector<16x64xbf16>
    %210 = vector.shape_cast %18 : vector<1x64xi1> to vector<1x64xi1>
    %211 = vector.broadcast %210 : vector<1x64xi1> to vector<16x64xi1>
    %212 = arith.select %211, %208, %209 : vector<16x64xi1>, vector<16x64xbf16>
    %c96_163 = arith.constant 96 : index
    %c0_164 = arith.constant 0 : index
    %213 = vector.load %arg16[%c96_163, %c0_164] : memref<144x128xbf16, #tpu.memory_space<vmem>>, vector<16x64xbf16>
    tpu.vector_store %arg16[%c96_163, %c0_164], %212 {strides = array<i32>} : memref<144x128xbf16, #tpu.memory_space<vmem>>, vector<16x64xbf16>,
    %c0_165 = arith.constant 0 : index
    %c98_166 = arith.constant 98 : index
    %214 = vector.load %arg15[%c0_165, %c98_166] : memref<16x164xbf16, #tpu.memory_space<vmem>>, vector<16x64xbf16>
    %cst_167 = arith.constant 0.000000e+00 : bf16
    %215 = vector.broadcast %cst_167 : bf16 to vector<16x64xbf16>
    %216 = vector.shape_cast %18 : vector<1x64xi1> to vector<1x64xi1>
    %217 = vector.broadcast %216 : vector<1x64xi1> to vector<16x64xi1>
    %218 = arith.select %217, %214, %215 : vector<16x64xi1>, vector<16x64xbf16>
    %c96_168 = arith.constant 96 : index
    %c64_169 = arith.constant 64 : index
    %219 = vector.load %arg16[%c96_168, %c64_169] : memref<144x128xbf16, #tpu.memory_space<vmem>>, vector<16x64xbf16>
    tpu.vector_store %arg16[%c96_168, %c64_169], %218 {strides = array<i32>} : memref<144x128xbf16, #tpu.memory_space<vmem>>, vector<16x64xbf16>,
    %c0_170 = arith.constant 0 : index
    %c17_171 = arith.constant 17 : index
    %220 = vector.load %arg15[%c0_170, %c17_171] : memref<16x164xbf16, #tpu.memory_space<vmem>>, vector<16x64xbf16>
    %c112_172 = arith.constant 112 : index
    %c0_173 = arith.constant 0 : index
    %221 = vector.load %arg16[%c112_172, %c0_173] : memref<144x128xbf16, #tpu.memory_space<vmem>>, vector<16x64xbf16>
    tpu.vector_store %arg16[%c112_172, %c0_173], %220 {strides = array<i32>} : memref<144x128xbf16, #tpu.memory_space<vmem>>, vector<16x64xbf16>,
    %c0_174 = arith.constant 0 : index
    %c99_175 = arith.constant 99 : index
    %222 = vector.load %arg15[%c0_174, %c99_175] : memref<16x164xbf16, #tpu.memory_space<vmem>>, vector<16x64xbf16>
    %c112_176 = arith.constant 112 : index
    %c64_177 = arith.constant 64 : index
    %223 = vector.load %arg16[%c112_176, %c64_177] : memref<144x128xbf16, #tpu.memory_space<vmem>>, vector<16x64xbf16>
    tpu.vector_store %arg16[%c112_176, %c64_177], %222 {strides = array<i32>} : memref<144x128xbf16, #tpu.memory_space<vmem>>, vector<16x64xbf16>,
    %c0_178 = arith.constant 0 : index
    %c18_179 = arith.constant 18 : index
    %224 = vector.load %arg15[%c0_178, %c18_179] : memref<16x164xbf16, #tpu.memory_space<vmem>>, vector<16x64xbf16>
    %cst_180 = arith.constant 0.000000e+00 : bf16
    %225 = vector.broadcast %cst_180 : bf16 to vector<16x64xbf16>
    %226 = vector.shape_cast %20 : vector<1x64xi1> to vector<1x64xi1>
    %227 = vector.broadcast %226 : vector<1x64xi1> to vector<16x64xi1>
    %228 = arith.select %227, %224, %225 : vector<16x64xi1>, vector<16x64xbf16>
    %c128_181 = arith.constant 128 : index
    %c0_182 = arith.constant 0 : index
    %229 = vector.load %arg16[%c128_181, %c0_182] : memref<144x128xbf16, #tpu.memory_space<vmem>>, vector<16x64xbf16>
    tpu.vector_store %arg16[%c128_181, %c0_182], %228 {strides = array<i32>} : memref<144x128xbf16, #tpu.memory_space<vmem>>, vector<16x64xbf16>,
    %c0_183 = arith.constant 0 : index
    %c100_184 = arith.constant 100 : index
    %230 = vector.load %arg15[%c0_183, %c100_184] : memref<16x164xbf16, #tpu.memory_space<vmem>>, vector<16x64xbf16>
    %cst_185 = arith.constant 0.000000e+00 : bf16
    %231 = vector.broadcast %cst_185 : bf16 to vector<16x64xbf16>
    %232 = vector.shape_cast %20 : vector<1x64xi1> to vector<1x64xi1>
    %233 = vector.broadcast %232 : vector<1x64xi1> to vector<16x64xi1>
    %234 = arith.select %233, %230, %231 : vector<16x64xi1>, vector<16x64xbf16>
    %c128_186 = arith.constant 128 : index
    %c64_187 = arith.constant 64 : index
    %235 = vector.load %arg16[%c128_186, %c64_187] : memref<144x128xbf16, #tpu.memory_space<vmem>>, vector<16x64xbf16>
    tpu.vector_store %arg16[%c128_186, %c64_187], %234 {strides = array<i32>} : memref<144x128xbf16, #tpu.memory_space<vmem>>, vector<16x64xbf16>,
    %c0_188 = arith.constant 0 : index
    %c0_189 = arith.constant 0 : index
    %236 = vector.load %arg16[%c0_188, %c0_189] : memref<144x128xbf16, #tpu.memory_space<vmem>>, vector<144x128xbf16>
    %cst_190 = arith.constant dense<0.000000e+00> : vector<8x128xf32>
    %237 = tpu.matmul %146, %236, %cst_190 {dimension_numbers = #tpu.dot_dimension_numbers<[1], [0], [0], [1], [0, 0, 1, 1], [], []>} : vector<8x144xbf16>, vector<144x128xbf16>, vector<8x128xf32> -> vector<8x128xf32>
    %c0_191 = arith.constant 0 : index
    %c0_192 = arith.constant 0 : index
    %238 = vector.load %arg8[%c0_191, %c0_192] : memref<8x1xf32, #tpu.memory_space<vmem>>, vector<8x1xf32>
    %c0_193 = arith.constant 0 : index
    %c0_194 = arith.constant 0 : index
    %239 = vector.load %arg9[%c0_193, %c0_194] : memref<8x1xf32, #tpu.memory_space<vmem>>, vector<8x1xf32>
    %240 = vector.broadcast %238 : vector<8x1xf32> to vector<8x128xf32>
    %241 = arith.mulf %237, %240 : vector<8x128xf32>
    %242 = vector.broadcast %239 : vector<8x1xf32> to vector<8x128xf32>
    %243 = arith.addf %241, %242 : vector<8x128xf32>
    %cst_195 = arith.constant 0.000000e+00 : f32
    %244 = vector.broadcast %cst_195 : f32 to vector<8x128xf32>
    %245 = arith.maximumf %243, %244 : vector<8x128xf32>
    %c0_196 = arith.constant 0 : index
    %c0_197 = arith.constant 0 : index
    %246 = vector.load %arg10[%c0_196, %c0_197] : memref<8x72xbf16, #tpu.memory_space<vmem>>, vector<8x72xbf16>
    %247 = arith.truncf %245 : vector<8x128xf32> to vector<8x128xbf16>
    %248 = vector.extract_strided_slice %247 {offsets = [0, 0], sizes = [8, 64], strides = [1, 1]} : vector<8x128xbf16> to vector<8x64xbf16>
    %c0_198 = arith.constant 0 : index
    %c9_199 = arith.constant 9 : index
    %249 = vector.load %arg15[%c0_198, %c9_199] : memref<16x164xbf16, #tpu.memory_space<vmem>>, vector<8x64xbf16>
    tpu.vector_store %arg15[%c0_198, %c9_199], %248 {strides = array<i32>} : memref<16x164xbf16, #tpu.memory_space<vmem>>, vector<8x64xbf16>,
    %250 = vector.extract_strided_slice %247 {offsets = [0, 64], sizes = [8, 64], strides = [1, 1]} : vector<8x128xbf16> to vector<8x64xbf16>
    %c0_200 = arith.constant 0 : index
    %c91_201 = arith.constant 91 : index
    %251 = vector.load %arg15[%c0_200, %c91_201] : memref<16x164xbf16, #tpu.memory_space<vmem>>, vector<8x64xbf16>
    tpu.vector_store %arg15[%c0_200, %c91_201], %250 {strides = array<i32>} : memref<16x164xbf16, #tpu.memory_space<vmem>>, vector<8x64xbf16>,
    %c0_202 = arith.constant 0 : index
    %c0_203 = arith.constant 0 : index
    %252 = vector.load %arg15[%c0_202, %c0_203] : memref<16x164xbf16, #tpu.memory_space<vmem>>, vector<8x64xbf16>
    %cst_204 = arith.constant 0.000000e+00 : bf16
    %253 = vector.broadcast %cst_204 : bf16 to vector<8x64xbf16>
    %254 = vector.shape_cast %18 : vector<1x64xi1> to vector<1x64xi1>
    %255 = vector.broadcast %254 : vector<1x64xi1> to vector<8x64xi1>
    %256 = arith.select %255, %252, %253 : vector<8x64xi1>, vector<8x64xbf16>
    %c0_205 = arith.constant 0 : index
    %c0_206 = arith.constant 0 : index
    %257 = vector.load %arg16[%c0_205, %c0_206] : memref<144x128xbf16, #tpu.memory_space<vmem>>, vector<8x64xbf16>
    tpu.vector_store %arg16[%c0_205, %c0_206], %256 {strides = array<i32>} : memref<144x128xbf16, #tpu.memory_space<vmem>>, vector<8x64xbf16>,
    %c0_207 = arith.constant 0 : index
    %c82_208 = arith.constant 82 : index
    %258 = vector.load %arg15[%c0_207, %c82_208] : memref<16x164xbf16, #tpu.memory_space<vmem>>, vector<8x64xbf16>
    %cst_209 = arith.constant 0.000000e+00 : bf16
    %259 = vector.broadcast %cst_209 : bf16 to vector<8x64xbf16>
    %260 = vector.shape_cast %18 : vector<1x64xi1> to vector<1x64xi1>
    %261 = vector.broadcast %260 : vector<1x64xi1> to vector<8x64xi1>
    %262 = arith.select %261, %258, %259 : vector<8x64xi1>, vector<8x64xbf16>
    %c0_210 = arith.constant 0 : index
    %c64_211 = arith.constant 64 : index
    %263 = vector.load %arg16[%c0_210, %c64_211] : memref<144x128xbf16, #tpu.memory_space<vmem>>, vector<8x64xbf16>
    tpu.vector_store %arg16[%c0_210, %c64_211], %262 {strides = array<i32>} : memref<144x128xbf16, #tpu.memory_space<vmem>>, vector<8x64xbf16>,
    %c0_212 = arith.constant 0 : index
    %c1_213 = arith.constant 1 : index
    %264 = vector.load %arg15[%c0_212, %c1_213] : memref<16x164xbf16, #tpu.memory_space<vmem>>, vector<8x64xbf16>
    %c8_214 = arith.constant 8 : index
    %c0_215 = arith.constant 0 : index
    %265 = vector.load %arg16[%c8_214, %c0_215] : memref<144x128xbf16, #tpu.memory_space<vmem>>, vector<8x64xbf16>
    tpu.vector_store %arg16[%c8_214, %c0_215], %264 {strides = array<i32>} : memref<144x128xbf16, #tpu.memory_space<vmem>>, vector<8x64xbf16>,
    %c0_216 = arith.constant 0 : index
    %c83_217 = arith.constant 83 : index
    %266 = vector.load %arg15[%c0_216, %c83_217] : memref<16x164xbf16, #tpu.memory_space<vmem>>, vector<8x64xbf16>
    %c8_218 = arith.constant 8 : index
    %c64_219 = arith.constant 64 : index
    %267 = vector.load %arg16[%c8_218, %c64_219] : memref<144x128xbf16, #tpu.memory_space<vmem>>, vector<8x64xbf16>
    tpu.vector_store %arg16[%c8_218, %c64_219], %266 {strides = array<i32>} : memref<144x128xbf16, #tpu.memory_space<vmem>>, vector<8x64xbf16>,
    %c0_220 = arith.constant 0 : index
    %c2_221 = arith.constant 2 : index
    %268 = vector.load %arg15[%c0_220, %c2_221] : memref<16x164xbf16, #tpu.memory_space<vmem>>, vector<8x64xbf16>
    %cst_222 = arith.constant 0.000000e+00 : bf16
    %269 = vector.broadcast %cst_222 : bf16 to vector<8x64xbf16>
    %270 = vector.shape_cast %20 : vector<1x64xi1> to vector<1x64xi1>
    %271 = vector.broadcast %270 : vector<1x64xi1> to vector<8x64xi1>
    %272 = arith.select %271, %268, %269 : vector<8x64xi1>, vector<8x64xbf16>
    %c16_223 = arith.constant 16 : index
    %c0_224 = arith.constant 0 : index
    %273 = vector.load %arg16[%c16_223, %c0_224] : memref<144x128xbf16, #tpu.memory_space<vmem>>, vector<8x64xbf16>
    tpu.vector_store %arg16[%c16_223, %c0_224], %272 {strides = array<i32>} : memref<144x128xbf16, #tpu.memory_space<vmem>>, vector<8x64xbf16>,
    %c0_225 = arith.constant 0 : index
    %c84_226 = arith.constant 84 : index
    %274 = vector.load %arg15[%c0_225, %c84_226] : memref<16x164xbf16, #tpu.memory_space<vmem>>, vector<8x64xbf16>
    %cst_227 = arith.constant 0.000000e+00 : bf16
    %275 = vector.broadcast %cst_227 : bf16 to vector<8x64xbf16>
    %276 = vector.shape_cast %20 : vector<1x64xi1> to vector<1x64xi1>
    %277 = vector.broadcast %276 : vector<1x64xi1> to vector<8x64xi1>
    %278 = arith.select %277, %274, %275 : vector<8x64xi1>, vector<8x64xbf16>
    %c16_228 = arith.constant 16 : index
    %c64_229 = arith.constant 64 : index
    %279 = vector.load %arg16[%c16_228, %c64_229] : memref<144x128xbf16, #tpu.memory_space<vmem>>, vector<8x64xbf16>
    tpu.vector_store %arg16[%c16_228, %c64_229], %278 {strides = array<i32>} : memref<144x128xbf16, #tpu.memory_space<vmem>>, vector<8x64xbf16>,
    %c0_230 = arith.constant 0 : index
    %c8_231 = arith.constant 8 : index
    %280 = vector.load %arg15[%c0_230, %c8_231] : memref<16x164xbf16, #tpu.memory_space<vmem>>, vector<8x64xbf16>
    %cst_232 = arith.constant 0.000000e+00 : bf16
    %281 = vector.broadcast %cst_232 : bf16 to vector<8x64xbf16>
    %282 = vector.shape_cast %18 : vector<1x64xi1> to vector<1x64xi1>
    %283 = vector.broadcast %282 : vector<1x64xi1> to vector<8x64xi1>
    %284 = arith.select %283, %280, %281 : vector<8x64xi1>, vector<8x64xbf16>
    %c24 = arith.constant 24 : index
    %c0_233 = arith.constant 0 : index
    %285 = vector.load %arg16[%c24, %c0_233] : memref<144x128xbf16, #tpu.memory_space<vmem>>, vector<8x64xbf16>
    tpu.vector_store %arg16[%c24, %c0_233], %284 {strides = array<i32>} : memref<144x128xbf16, #tpu.memory_space<vmem>>, vector<8x64xbf16>,
    %c0_234 = arith.constant 0 : index
    %c90_235 = arith.constant 90 : index
    %286 = vector.load %arg15[%c0_234, %c90_235] : memref<16x164xbf16, #tpu.memory_space<vmem>>, vector<8x64xbf16>
    %cst_236 = arith.constant 0.000000e+00 : bf16
    %287 = vector.broadcast %cst_236 : bf16 to vector<8x64xbf16>
    %288 = vector.shape_cast %18 : vector<1x64xi1> to vector<1x64xi1>
    %289 = vector.broadcast %288 : vector<1x64xi1> to vector<8x64xi1>
    %290 = arith.select %289, %286, %287 : vector<8x64xi1>, vector<8x64xbf16>
    %c24_237 = arith.constant 24 : index
    %c64_238 = arith.constant 64 : index
    %291 = vector.load %arg16[%c24_237, %c64_238] : memref<144x128xbf16, #tpu.memory_space<vmem>>, vector<8x64xbf16>
    tpu.vector_store %arg16[%c24_237, %c64_238], %290 {strides = array<i32>} : memref<144x128xbf16, #tpu.memory_space<vmem>>, vector<8x64xbf16>,
    %c0_239 = arith.constant 0 : index
    %c9_240 = arith.constant 9 : index
    %292 = vector.load %arg15[%c0_239, %c9_240] : memref<16x164xbf16, #tpu.memory_space<vmem>>, vector<8x64xbf16>
    %c32_241 = arith.constant 32 : index
    %c0_242 = arith.constant 0 : index
    %293 = vector.load %arg16[%c32_241, %c0_242] : memref<144x128xbf16, #tpu.memory_space<vmem>>, vector<8x64xbf16>
    tpu.vector_store %arg16[%c32_241, %c0_242], %292 {strides = array<i32>} : memref<144x128xbf16, #tpu.memory_space<vmem>>, vector<8x64xbf16>,
    %c0_243 = arith.constant 0 : index
    %c91_244 = arith.constant 91 : index
    %294 = vector.load %arg15[%c0_243, %c91_244] : memref<16x164xbf16, #tpu.memory_space<vmem>>, vector<8x64xbf16>
    %c32_245 = arith.constant 32 : index
    %c64_246 = arith.constant 64 : index
    %295 = vector.load %arg16[%c32_245, %c64_246] : memref<144x128xbf16, #tpu.memory_space<vmem>>, vector<8x64xbf16>
    tpu.vector_store %arg16[%c32_245, %c64_246], %294 {strides = array<i32>} : memref<144x128xbf16, #tpu.memory_space<vmem>>, vector<8x64xbf16>,
    %c0_247 = arith.constant 0 : index
    %c10_248 = arith.constant 10 : index
    %296 = vector.load %arg15[%c0_247, %c10_248] : memref<16x164xbf16, #tpu.memory_space<vmem>>, vector<8x64xbf16>
    %cst_249 = arith.constant 0.000000e+00 : bf16
    %297 = vector.broadcast %cst_249 : bf16 to vector<8x64xbf16>
    %298 = vector.shape_cast %20 : vector<1x64xi1> to vector<1x64xi1>
    %299 = vector.broadcast %298 : vector<1x64xi1> to vector<8x64xi1>
    %300 = arith.select %299, %296, %297 : vector<8x64xi1>, vector<8x64xbf16>
    %c40 = arith.constant 40 : index
    %c0_250 = arith.constant 0 : index
    %301 = vector.load %arg16[%c40, %c0_250] : memref<144x128xbf16, #tpu.memory_space<vmem>>, vector<8x64xbf16>
    tpu.vector_store %arg16[%c40, %c0_250], %300 {strides = array<i32>} : memref<144x128xbf16, #tpu.memory_space<vmem>>, vector<8x64xbf16>,
    %c0_251 = arith.constant 0 : index
    %c92_252 = arith.constant 92 : index
    %302 = vector.load %arg15[%c0_251, %c92_252] : memref<16x164xbf16, #tpu.memory_space<vmem>>, vector<8x64xbf16>
    %cst_253 = arith.constant 0.000000e+00 : bf16
    %303 = vector.broadcast %cst_253 : bf16 to vector<8x64xbf16>
    %304 = vector.shape_cast %20 : vector<1x64xi1> to vector<1x64xi1>
    %305 = vector.broadcast %304 : vector<1x64xi1> to vector<8x64xi1>
    %306 = arith.select %305, %302, %303 : vector<8x64xi1>, vector<8x64xbf16>
    %c40_254 = arith.constant 40 : index
    %c64_255 = arith.constant 64 : index
    %307 = vector.load %arg16[%c40_254, %c64_255] : memref<144x128xbf16, #tpu.memory_space<vmem>>, vector<8x64xbf16>
    tpu.vector_store %arg16[%c40_254, %c64_255], %306 {strides = array<i32>} : memref<144x128xbf16, #tpu.memory_space<vmem>>, vector<8x64xbf16>,
    %c0_256 = arith.constant 0 : index
    %c16_257 = arith.constant 16 : index
    %308 = vector.load %arg15[%c0_256, %c16_257] : memref<16x164xbf16, #tpu.memory_space<vmem>>, vector<8x64xbf16>
    %cst_258 = arith.constant 0.000000e+00 : bf16
    %309 = vector.broadcast %cst_258 : bf16 to vector<8x64xbf16>
    %310 = vector.shape_cast %18 : vector<1x64xi1> to vector<1x64xi1>
    %311 = vector.broadcast %310 : vector<1x64xi1> to vector<8x64xi1>
    %312 = arith.select %311, %308, %309 : vector<8x64xi1>, vector<8x64xbf16>
    %c48_259 = arith.constant 48 : index
    %c0_260 = arith.constant 0 : index
    %313 = vector.load %arg16[%c48_259, %c0_260] : memref<144x128xbf16, #tpu.memory_space<vmem>>, vector<8x64xbf16>
    tpu.vector_store %arg16[%c48_259, %c0_260], %312 {strides = array<i32>} : memref<144x128xbf16, #tpu.memory_space<vmem>>, vector<8x64xbf16>,
    %c0_261 = arith.constant 0 : index
    %c98_262 = arith.constant 98 : index
    %314 = vector.load %arg15[%c0_261, %c98_262] : memref<16x164xbf16, #tpu.memory_space<vmem>>, vector<8x64xbf16>
    %cst_263 = arith.constant 0.000000e+00 : bf16
    %315 = vector.broadcast %cst_263 : bf16 to vector<8x64xbf16>
    %316 = vector.shape_cast %18 : vector<1x64xi1> to vector<1x64xi1>
    %317 = vector.broadcast %316 : vector<1x64xi1> to vector<8x64xi1>
    %318 = arith.select %317, %314, %315 : vector<8x64xi1>, vector<8x64xbf16>
    %c48_264 = arith.constant 48 : index
    %c64_265 = arith.constant 64 : index
    %319 = vector.load %arg16[%c48_264, %c64_265] : memref<144x128xbf16, #tpu.memory_space<vmem>>, vector<8x64xbf16>
    tpu.vector_store %arg16[%c48_264, %c64_265], %318 {strides = array<i32>} : memref<144x128xbf16, #tpu.memory_space<vmem>>, vector<8x64xbf16>,
    %c0_266 = arith.constant 0 : index
    %c17_267 = arith.constant 17 : index
    %320 = vector.load %arg15[%c0_266, %c17_267] : memref<16x164xbf16, #tpu.memory_space<vmem>>, vector<8x64xbf16>
    %c56 = arith.constant 56 : index
    %c0_268 = arith.constant 0 : index
    %321 = vector.load %arg16[%c56, %c0_268] : memref<144x128xbf16, #tpu.memory_space<vmem>>, vector<8x64xbf16>
    tpu.vector_store %arg16[%c56, %c0_268], %320 {strides = array<i32>} : memref<144x128xbf16, #tpu.memory_space<vmem>>, vector<8x64xbf16>,
    %c0_269 = arith.constant 0 : index
    %c99_270 = arith.constant 99 : index
    %322 = vector.load %arg15[%c0_269, %c99_270] : memref<16x164xbf16, #tpu.memory_space<vmem>>, vector<8x64xbf16>
    %c56_271 = arith.constant 56 : index
    %c64_272 = arith.constant 64 : index
    %323 = vector.load %arg16[%c56_271, %c64_272] : memref<144x128xbf16, #tpu.memory_space<vmem>>, vector<8x64xbf16>
    tpu.vector_store %arg16[%c56_271, %c64_272], %322 {strides = array<i32>} : memref<144x128xbf16, #tpu.memory_space<vmem>>, vector<8x64xbf16>,
    %c0_273 = arith.constant 0 : index
    %c18_274 = arith.constant 18 : index
    %324 = vector.load %arg15[%c0_273, %c18_274] : memref<16x164xbf16, #tpu.memory_space<vmem>>, vector<8x64xbf16>
    %cst_275 = arith.constant 0.000000e+00 : bf16
    %325 = vector.broadcast %cst_275 : bf16 to vector<8x64xbf16>
    %326 = vector.shape_cast %20 : vector<1x64xi1> to vector<1x64xi1>
    %327 = vector.broadcast %326 : vector<1x64xi1> to vector<8x64xi1>
    %328 = arith.select %327, %324, %325 : vector<8x64xi1>, vector<8x64xbf16>
    %c64_276 = arith.constant 64 : index
    %c0_277 = arith.constant 0 : index
    %329 = vector.load %arg16[%c64_276, %c0_277] : memref<144x128xbf16, #tpu.memory_space<vmem>>, vector<8x64xbf16>
    tpu.vector_store %arg16[%c64_276, %c0_277], %328 {strides = array<i32>} : memref<144x128xbf16, #tpu.memory_space<vmem>>, vector<8x64xbf16>,
    %c0_278 = arith.constant 0 : index
    %c100_279 = arith.constant 100 : index
    %330 = vector.load %arg15[%c0_278, %c100_279] : memref<16x164xbf16, #tpu.memory_space<vmem>>, vector<8x64xbf16>
    %cst_280 = arith.constant 0.000000e+00 : bf16
    %331 = vector.broadcast %cst_280 : bf16 to vector<8x64xbf16>
    %332 = vector.shape_cast %20 : vector<1x64xi1> to vector<1x64xi1>
    %333 = vector.broadcast %332 : vector<1x64xi1> to vector<8x64xi1>
    %334 = arith.select %333, %330, %331 : vector<8x64xi1>, vector<8x64xbf16>
    %c64_281 = arith.constant 64 : index
    %c64_282 = arith.constant 64 : index
    %335 = vector.load %arg16[%c64_281, %c64_282] : memref<144x128xbf16, #tpu.memory_space<vmem>>, vector<8x64xbf16>
    tpu.vector_store %arg16[%c64_281, %c64_282], %334 {strides = array<i32>} : memref<144x128xbf16, #tpu.memory_space<vmem>>, vector<8x64xbf16>,
    %c0_283 = arith.constant 0 : index
    %c0_284 = arith.constant 0 : index
    %336 = vector.load %arg16[%c0_283, %c0_284] : memref<144x128xbf16, #tpu.memory_space<vmem>>, vector<72x128xbf16>
    %cst_285 = arith.constant dense<0.000000e+00> : vector<8x128xf32>
    %337 = tpu.matmul %246, %336, %cst_285 {dimension_numbers = #tpu.dot_dimension_numbers<[1], [0], [0], [1], [0, 0, 1, 1], [], []>} : vector<8x72xbf16>, vector<72x128xbf16>, vector<8x128xf32> -> vector<8x128xf32>
    %338 = vector.extract_strided_slice %37 {offsets = [0, 0], sizes = [16, 128], strides = [1, 1]} : vector<32x128xf32> to vector<16x128xf32>
    %339 = arith.addf %137, %338 : vector<16x128xf32>
    %c0_286 = arith.constant 0 : index
    %c0_287 = arith.constant 0 : index
    %340 = vector.load %arg14[%c0_286, %c0_287] : memref<32x128xf32, #tpu.memory_space<vmem>>, vector<16x128xf32>
    tpu.vector_store %arg14[%c0_286, %c0_287], %339 {strides = array<i32>} : memref<32x128xf32, #tpu.memory_space<vmem>>, vector<16x128xf32>,
    %341 = vector.extract_strided_slice %37 {offsets = [16, 0], sizes = [8, 128], strides = [1, 1]} : vector<32x128xf32> to vector<8x128xf32>
    %342 = arith.addf %237, %341 : vector<8x128xf32>
    %c16_288 = arith.constant 16 : index
    %c0_289 = arith.constant 0 : index
    %343 = vector.load %arg14[%c16_288, %c0_289] : memref<32x128xf32, #tpu.memory_space<vmem>>, vector<8x128xf32>
    tpu.vector_store %arg14[%c16_288, %c0_289], %342 {strides = array<i32>} : memref<32x128xf32, #tpu.memory_space<vmem>>, vector<8x128xf32>,
    %344 = vector.extract_strided_slice %37 {offsets = [24, 0], sizes = [8, 128], strides = [1, 1]} : vector<32x128xf32> to vector<8x128xf32>
    %345 = arith.addf %337, %344 : vector<8x128xf32>
    %c24_290 = arith.constant 24 : index
    %c0_291 = arith.constant 0 : index
    %346 = vector.load %arg14[%c24_290, %c0_291] : memref<32x128xf32, #tpu.memory_space<vmem>>, vector<8x128xf32>
    tpu.vector_store %arg14[%c24_290, %c0_291], %345 {strides = array<i32>} : memref<32x128xf32, #tpu.memory_space<vmem>>, vector<8x128xf32>,
    return
  }
  func.func @transform_0(%arg0: i32) -> (i32, i32) {
    %c0_i32 = arith.constant 0 : i32
    %c0_i32_0 = arith.constant 0 : i32
    return %c0_i32, %arg0 : i32, i32
  }
  func.func @transform_1(%arg0: i32) -> (i32, i32) {
    %c0_i32 = arith.constant 0 : i32
    %c0_i32_0 = arith.constant 0 : i32
    %c0_i32_1 = arith.constant 0 : i32
    return %c0_i32, %c0_i32_0 : i32, i32
  }
  func.func @transform_2(%arg0: i32) -> (i32, i32) {
    %c0_i32 = arith.constant 0 : i32
    %c0_i32_0 = arith.constant 0 : i32
    %c0_i32_1 = arith.constant 0 : i32
    return %c0_i32, %c0_i32_0 : i32, i32
  }
  func.func @transform_3(%arg0: i32) -> (i32, i32) {
    %c0_i32 = arith.constant 0 : i32
    %c0_i32_0 = arith.constant 0 : i32
    %c0_i32_1 = arith.constant 0 : i32
    return %c0_i32, %c0_i32_0 : i32, i32
  }
  func.func @transform_4(%arg0: i32) -> (i32, i32) {
    %c0_i32 = arith.constant 0 : i32
    %c0_i32_0 = arith.constant 0 : i32
    %c0_i32_1 = arith.constant 0 : i32
    return %c0_i32, %c0_i32_0 : i32, i32
  }
  func.func @transform_5(%arg0: i32) -> (i32, i32) {
    %c0_i32 = arith.constant 0 : i32
    %c0_i32_0 = arith.constant 0 : i32
    %c0_i32_1 = arith.constant 0 : i32
    return %c0_i32, %c0_i32_0 : i32, i32
  }
  func.func @transform_6(%arg0: i32) -> (i32, i32) {
    %c0_i32 = arith.constant 0 : i32
    %c0_i32_0 = arith.constant 0 : i32
    %c0_i32_1 = arith.constant 0 : i32
    return %c0_i32, %c0_i32_0 : i32, i32
  }
  func.func @transform_7(%arg0: i32) -> (i32, i32) {
    %c0_i32 = arith.constant 0 : i32
    %c0_i32_0 = arith.constant 0 : i32
    %c0_i32_1 = arith.constant 0 : i32
    return %c0_i32, %c0_i32_0 : i32, i32
  }
  func.func @transform_8(%arg0: i32) -> (i32, i32) {
    %c0_i32 = arith.constant 0 : i32
    %c0_i32_0 = arith.constant 0 : i32
    %c0_i32_1 = arith.constant 0 : i32
    return %c0_i32, %c0_i32_0 : i32, i32
  }
  func.func @transform_9(%arg0: i32) -> (i32, i32) {
    %c0_i32 = arith.constant 0 : i32
    %c0_i32_0 = arith.constant 0 : i32
    %c0_i32_1 = arith.constant 0 : i32
    return %c0_i32, %c0_i32_0 : i32, i32
  }
  func.func @transform_10(%arg0: i32) -> (i32, i32) {
    %c0_i32 = arith.constant 0 : i32
    %c0_i32_0 = arith.constant 0 : i32
    %c0_i32_1 = arith.constant 0 : i32
    return %c0_i32, %c0_i32_0 : i32, i32
  }
  func.func @transform_11(%arg0: i32) -> (i32, i32) {
    %c0_i32 = arith.constant 0 : i32
    %c0_i32_0 = arith.constant 0 : i32
    %c0_i32_1 = arith.constant 0 : i32
    return %c0_i32, %c0_i32_0 : i32, i32
  }
  func.func @transform_12(%arg0: i32) -> (i32, i32) {
    %c0_i32 = arith.constant 0 : i32
    %c0_i32_0 = arith.constant 0 : i32
    %c0_i32_1 = arith.constant 0 : i32
    return %c0_i32, %c0_i32_0 : i32, i32
  }
  func.func @transform_13(%arg0: i32) -> (i32, i32) {
    %c0_i32 = arith.constant 0 : i32
    %c0_i32_0 = arith.constant 0 : i32
    return %c0_i32, %arg0 : i32, i32
  }
}

</mosaic_0001>

<llo_original>
// kernel: tpu_custom_call.1
$region0: #{tpu_custom_call.1}
  #allocation0 [shape = 'u32[]', space=smem, size = 0x4, offset = 0x4, fixed_abs, tag = 'smem constant byte address 0x4 - core index']
  #allocation1 [shape = 'u32[72,128]{1,0:T(1,128)}', space=vmem, size = 0x9000, scoped, tag = 'internal scratch']
  #allocation2 [shape = 'bf16[16,164]{1,0:T(8,128)(2,1)}', space=vmem, size = 0x2000, scoped, tag = 'scratch operand']
  #allocation3 [shape = 'bf16[144,128]{1,0:T(8,128)(2,1)}', space=vmem, size = 0x9000, scoped, tag = 'scratch operand']
  %s0 = inlined_call_operand.vmem [shape: f32[16,128], index: 0, kind: input, shape index: {}]
  %s1 = inlined_call_operand.vmem [shape: f32[16,1], index: 1, kind: input, shape index: {}]
  %s2 = inlined_call_operand.vmem [shape: f32[16,1], index: 2, kind: input, shape index: {}]
  %s3 = inlined_call_operand.vmem [shape: bf16[16,144], index: 3, kind: input, shape index: {}]
  %s4 = inlined_call_operand.vmem [shape: f32[16,1], index: 4, kind: input, shape index: {}]
  %s5 = inlined_call_operand.vmem [shape: f32[16,1], index: 5, kind: input, shape index: {}]
  %s6 = inlined_call_operand.vmem [shape: bf16[8,144], index: 6, kind: input, shape index: {}]
  %s7 = inlined_call_operand.vmem [shape: f32[8,1], index: 7, kind: input, shape index: {}]
  %s8 = inlined_call_operand.vmem [shape: f32[8,1], index: 8, kind: input, shape index: {}]
  %s9 = inlined_call_operand.vmem [shape: bf16[8,72], index: 9, kind: input, shape index: {}]
  %s10 = inlined_call_operand.vmem [shape: f32[16,1], index: 10, kind: input, shape index: {}]
  %s11 = inlined_call_operand.vmem [shape: f32[16,1], index: 11, kind: input, shape index: {}]
  %s12 = inlined_call_operand.vmem [shape: bf16[32,16], index: 12, kind: input, shape index: {}]
  %s13 = inlined_call_operand.hbm [shape: f32[32,128], index: 13, kind: output, shape index: {}]
  %s14 = sld [smem:[#allocation0]]
  $region62: #{tpu_custom_call.1} parent=0
    _
  %s16 = ssub.s32 1, %s14
  %s17 = scalar_select 0, %s16, %s14
  $region1: #{tpu_custom_call.1} parent=0
    #allocation4 [shape = 'u8[16384]{0}', space=vmem, size = 0x4000, scoped, tag = 'output window, operand 0, single buffered']
    #allocation5 [shape = 's32[1]{0}', space=sflag, size = 0x4, scoped, tag = 'scoped memory for tpu_custom_call.1']
    %18 = vsyncpa [#allocation5], 0
    // Predicated region
    $region2: #{tpu_custom_call.1} parent=1 // pred_check
      _
    $region3: #{tpu_custom_call.1} parent=1 // pred_check_branch
      %20 = sbr.rel (0) target = $region5
    $region4: #{tpu_custom_call.1} parent=1 // pred_region
      _
    $region5: #{tpu_custom_call.1} parent=1 // pred_fallthru
      _
    // Predicated region
    $region6: #{tpu_custom_call.1} parent=1 // pred_check
      _
    $region7: #{tpu_custom_call.1} parent=1 // pred_check_branch
      %22 = sbr.rel (0) target = $region9
    $region8: #{tpu_custom_call.1} parent=1 // pred_region
      _
    $region9: #{tpu_custom_call.1} parent=1 // pred_fallthru
      _
    // Predicated region
    $region10: #{tpu_custom_call.1} parent=1 // pred_check
      _
    $region11: #{tpu_custom_call.1} parent=1 // pred_check_branch
      %24 = sbr.rel (0) target = $region13
    $region12: #{tpu_custom_call.1} parent=1 // pred_region
      _
    $region13: #{tpu_custom_call.1} parent=1 // pred_fallthru
      _
    // Predicated region
    $region14: #{tpu_custom_call.1} parent=1 // pred_check
      _
    $region15: #{tpu_custom_call.1} parent=1 // pred_check_branch
      %26 = sbr.rel (0) target = $region17
    $region16: #{tpu_custom_call.1} parent=1 // pred_region
      _
    $region17: #{tpu_custom_call.1} parent=1 // pred_fallthru
      _
    // Predicated region
    $region18: #{tpu_custom_call.1} parent=1 // pred_check
      _
    $region19: #{tpu_custom_call.1} parent=1 // pred_check_branch
      %28 = sbr.rel (0) target = $region21
    $region20: #{tpu_custom_call.1} parent=1 // pred_region
      _
    $region21: #{tpu_custom_call.1} parent=1 // pred_fallthru
      _
    // Predicated region
    $region22: #{tpu_custom_call.1} parent=1 // pred_check
      _
    $region23: #{tpu_custom_call.1} parent=1 // pred_check_branch
      %30 = sbr.rel (0) target = $region25
    $region24: #{tpu_custom_call.1} parent=1 // pred_region
      _
    $region25: #{tpu_custom_call.1} parent=1 // pred_fallthru
      _
    // Predicated region
    $region26: #{tpu_custom_call.1} parent=1 // pred_check
      _
    $region27: #{tpu_custom_call.1} parent=1 // pred_check_branch
      %32 = sbr.rel (0) target = $region29
    $region28: #{tpu_custom_call.1} parent=1 // pred_region
      _
    $region29: #{tpu_custom_call.1} parent=1 // pred_fallthru
      _
    // Predicated region
    $region30: #{tpu_custom_call.1} parent=1 // pred_check
      _
    $region31: #{tpu_custom_call.1} parent=1 // pred_check_branch
      %34 = sbr.rel (0) target = $region33
    $region32: #{tpu_custom_call.1} parent=1 // pred_region
      _
    $region33: #{tpu_custom_call.1} parent=1 // pred_fallthru
      _
    // Predicated region
    $region34: #{tpu_custom_call.1} parent=1 // pred_check
      _
    $region35: #{tpu_custom_call.1} parent=1 // pred_check_branch
      %36 = sbr.rel (0) target = $region37
    $region36: #{tpu_custom_call.1} parent=1 // pred_region
      _
    $region37: #{tpu_custom_call.1} parent=1 // pred_fallthru
      _
    // Predicated region
    $region38: #{tpu_custom_call.1} parent=1 // pred_check
      _
    $region39: #{tpu_custom_call.1} parent=1 // pred_check_branch
      %38 = sbr.rel (0) target = $region41
    $region40: #{tpu_custom_call.1} parent=1 // pred_region
      _
    $region41: #{tpu_custom_call.1} parent=1 // pred_fallthru
      _
    // Predicated region
    $region42: #{tpu_custom_call.1} parent=1 // pred_check
      _
    $region43: #{tpu_custom_call.1} parent=1 // pred_check_branch
      %40 = sbr.rel (0) target = $region45
    $region44: #{tpu_custom_call.1} parent=1 // pred_region
      _
    $region45: #{tpu_custom_call.1} parent=1 // pred_fallthru
      _
    // Predicated region
    $region46: #{tpu_custom_call.1} parent=1 // pred_check
      _
    $region47: #{tpu_custom_call.1} parent=1 // pred_check_branch
      %42 = sbr.rel (0) target = $region49
    $region48: #{tpu_custom_call.1} parent=1 // pred_region
      _
    $region49: #{tpu_custom_call.1} parent=1 // pred_fallthru
      _
    // Predicated region
    $region50: #{tpu_custom_call.1} parent=1 // pred_check
      _
    $region51: #{tpu_custom_call.1} parent=1 // pred_check_branch
      %44 = sbr.rel (0) target = $region53
    $region52: #{tpu_custom_call.1} parent=1 // pred_region
      _
    $region53: #{tpu_custom_call.1} parent=1 // pred_fallthru
      _
    %v48 = vlaneseq
    %v49 = vand.u32 %v48, 127
    %vm50 = vcmp.lt.s32.totalorder %v49, 0
    %v51 = vsub.s32 0, %v49
    %v52 = vsel %vm50, %v51, %v49
    %v53 = vshrl.u32 %v52, 3
    %v54 = vand.u32 %v52, 7
    %v55 = vsub.s32 0, %v54
    %v56 = vsel %vm50, %v55, %v54
    %vm57 = vcmp.ne.s32.totalorder %v56, 0
    %vm58 = vcmp.lt.s32.totalorder %v56, 0
    %vm59 = vmand %vm58, %vm57
    %v60 = vadd.s32 %v56, 8
    %v61 = vsel %vm59, %v60, %v56
    %vm62 = vcmp.ne.s32.totalorder %v61, 0
    %vm63 = vcmp.ne.s32.totalorder %v61, 7
    %vm64 = vcmask 68608
    %65 = vst.msk [vmem:[#allocation2] sm:$0xf] %vm64, 0
    %66 = vst.msk [vmem:[#allocation2 + $0x8] sm:$0xf] %vm64, 0
    %vm67 = vcmask 667208
    %68 = vst.msk [vmem:[#allocation2] sm:$0xf] %vm67, 0
    %69 = vst.msk [vmem:[#allocation2 + $0x8] sm:$0xf] %vm67, 0
    %vm70 = vcmask 741008
    %71 = vst.msk [vmem:[#allocation2] sm:$0xf] %vm70, 0
    %72 = vst.msk [vmem:[#allocation2 + $0x8] sm:$0xf] %vm70, 0
    %vm73 = vcmask 290008
    %74 = vst.msk [vmem:[#allocation2 + $0x4] sm:$0xf] %vm73, 0
    %75 = vst.msk [vmem:[#allocation2 + $0xc] sm:$0xf] %vm73, 0
    %v76 = vld [vmem:[%s0] sm:$0xff]
    %v77 = vld [vmem:[%s0 + $0x8] sm:$0xff]
    %v78 = vld [vmem:[%s10] sm:$0xff]
    %v79 = vld [vmem:[%s10 + $0x8] sm:$0xff]
    %v80 = vld [vmem:[%s11] sm:$0xff]
    %v81 = vld [vmem:[%s11 + $0x8] sm:$0xff]
    %83 = vset.pattern.permute.xlu0 0
    %84 = vperm.xlu0 %83, %v78
    %v85 = vpop.permute.xlu0 %84
    %88 = vset.pattern.permute.xlu0 0
    %89 = vperm.xlu0 %88, %v79
    %v90 = vpop.permute.xlu0 %89
    %v92 = vmul.f32 %v76, %v85
    %v93 = vmul.f32 %v77, %v90
    %95 = vset.pattern.permute.xlu0 0
    %96 = vperm.xlu0 %95, %v80
    %v97 = vpop.permute.xlu0 %96
    %100 = vset.pattern.permute.xlu0 0
    %101 = vperm.xlu0 %100, %v81
    %v102 = vpop.permute.xlu0 %101
    %v104 = vadd.f32 %v92, %v97
    %v105 = vadd.f32 %v93, %v102
    %v106 = vmax.f32 %v104, 0.0
    %v107 = vmax.f32 %v105, 0.0
    %v108 = vpack.c.bf16 %v107, %v106
    %v109 = vld [vmem:[%s12] sm:$0xf]
    %v110 = vld [vmem:[%s12 + $0x4] sm:$0xf]
    %v111 = vld [vmem:[%s12 + $0x8] sm:$0xf]
    %v112 = vld [vmem:[%s12 + $0xc] sm:$0xf]
    %v117 = vunpack.c.l.b16 %v109
    %v118 = vunpack.c.l.b16 %v110
    %v119 = vunpack.c.l.b16 %v111
    %v120 = vunpack.c.l.b16 %v112
    %v121 = vpack.c.b16 %v118, %v117
    %v122 = vpack.c.b16 %v120, %v119
    %vm123 = vcmask 130048
    %v125 = vsel %vm123, %v121, 0
    %v128 = vsel %vm123, %v122, 0
    %130 = vmatpush.bf16.msra.mxu0 0
    %131 = vmatpush.bf16.msra.mxu0 0
    %132 = vmatpush.bf16.msra.mxu0 0
    %133 = vmatpush.bf16.msra.mxu0 0
    %134 = vmatpush.bf16.msra.mxu0 0
    %135 = vmatpush.bf16.msra.mxu0 0
    %136 = vmatpush.bf16.msra.mxu0 0
    %137 = vmatpush.bf16.msra.mxu0 %v108
    %138 = vmatmul.bf16.gmra.mxu0 %v125
    %v139 = vpop.f32.mrf.mxu0
    %v140 = vadd.f32 0.0, %v139
    %v141 = vpop.f32.mrf.mxu0
    %v142 = vadd.f32 0.0, %v141
    %143 = vmatmul.bf16.gmra.mxu0 %v128
    %v144 = vpop.f32.mrf.mxu0
    %v145 = vadd.f32 0.0, %v144
    %v146 = vpop.f32.mrf.mxu0
    %v147 = vadd.f32 0.0, %v146
    %148 = vdwg.mxu0
    %v149 = vld [vmem:[%s1] sm:$0xff]
    %v150 = vld [vmem:[%s1 + $0x8] sm:$0xff]
    %v151 = vld [vmem:[%s2] sm:$0xff]
    %v152 = vld [vmem:[%s2 + $0x8] sm:$0xff]
    %154 = vset.pattern.permute.xlu0 0
    %155 = vperm.xlu0 %154, %v149
    %v156 = vpop.permute.xlu0 %155
    %159 = vset.pattern.permute.xlu0 0
    %160 = vperm.xlu0 %159, %v150
    %v161 = vpop.permute.xlu0 %160
    %v163 = vmul.f32 %v76, %v156
    %v164 = vmul.f32 %v77, %v161
    %166 = vset.pattern.permute.xlu0 0
    %167 = vperm.xlu0 %166, %v151
    %v168 = vpop.permute.xlu0 %167
    %171 = vset.pattern.permute.xlu0 0
    %172 = vperm.xlu0 %171, %v152
    %v173 = vpop.permute.xlu0 %172
    %v175 = vadd.f32 %v163, %v168
    %v176 = vadd.f32 %v164, %v173
    %v177 = vmax.f32 %v175, 0.0
    %v178 = vmax.f32 %v176, 0.0
    %v179 = vld [vmem:[%s3] sm:$0xff]
    %v180 = vld [vmem:[%s3 + $0x8] sm:$0xff]
    %v181 = vpack.c.bf16 %v177, %v177
    %v182 = vpack.c.bf16 %v178, %v178
    %185 = vrot.lane.b32.xlu0 %v181, 9
    %v186 = vpop.permute.xlu0 %185
    %187 = vrot.lane.b32.xlu0 %v182, 9
    %v188 = vpop.permute.xlu0 %187
    %vm191 = vcmask 592968
    %192 = vst.msk [vmem:[#allocation2] sm:$0xf] %vm191, %v186
    %193 = vst.msk [vmem:[#allocation2 + $0x8] sm:$0xf] %vm191, %v188
    %194 = vrot.lane.b32.xlu0 %v181, 27
    %v195 = vpop.permute.xlu0 %194
    %196 = vrot.lane.b32.xlu0 %v182, 27
    %v197 = vpop.permute.xlu0 %196
    %v198 = vrot.slane %v195, 4
    %v199 = vrot.slane %v197, 4
    %vm200 = vcmask 220160
    %v201 = vsel %vm200, %v198, %v195
    %v202 = vsel %vm200, %v199, %v197
    %vm205 = vcmask 1044184
    %vm206 = vcmask 220164
    %vm207 = vmor %vm206, %vm205
    %208 = vst.msk [vmem:[#allocation2] sm:$0xff] %vm207, %v201
    %209 = vst.msk [vmem:[#allocation2 + $0x8] sm:$0xff] %vm207, %v202
    %v210 = vld [vmem:[#allocation2] sm:$0xf]
    %v211 = vld [vmem:[#allocation2 + $0x8] sm:$0xf]
    %v212 = vsel %vm62, 1, 0
    %vm213 = vcmp.eq.s32.totalorder %v212, 1
    %vm214 = vmpackc.low %vm213, %vm213
    %v215 = vsel %vm214, %v210, 0
    %v216 = vsel %vm214, %v211, 0
    %vm217 = vcmask 519168
    %218 = vst.msk [vmem:[#allocation3] sm:$0xf] %vm217, %v215
    %219 = vst.msk [vmem:[#allocation3 + $0x4] sm:$0xf] %vm217, %v216
    %v220 = vld [vmem:[#allocation2] sm:$0xff]
    %v221 = vld [vmem:[#allocation2 + $0x8] sm:$0xff]
    %v222 = vsel %vm214, 65537, 0
    %223 = vrot.lane.b32.xlu0 %v222, 82
    %v224 = vpop.permute.xlu0 %223
    %v225 = vrot.slane %v224, 4
    %vm226 = vcmask 670720
    %v227 = vsel %vm226, %v225, %v224
    %v228 = vunpack.c.l.b16 %v227
    %v229 = vunpack.c.h.b16 %v227
    %v230 = vunpack.c.l.b16 0
    %v231 = vunpack.c.h.b16 0
    %vm232 = vcmp.ne.s32.totalorder %v228, %v230
    %vm233 = vcmp.ne.s32.totalorder %v229, %v231
    %vm234 = vmpackc.low %vm233, %vm232
    %v235 = vsel %vm234, %v220, 0
    %v236 = vsel %vm234, %v221, 0
    %239 = vrot.lane.b32.xlu0 %v235, 110
    %v240 = vpop.permute.xlu0 %239
    %241 = vrot.lane.b32.xlu0 %v236, 110
    %v242 = vpop.permute.xlu0 %241
    %v243 = vrot.slane %v240, 4
    %v244 = vrot.slane %v242, 4
    %vm245 = vcmask 900096
    %v246 = vsel %vm245, %v240, %v243
    %v247 = vsel %vm245, %v242, %v244
    %vm250 = vcmask 1043968
    %251 = vst.msk [vmem:[#allocation3] sm:$0xf] %vm250, %v246
    %252 = vst.msk [vmem:[#allocation3 + $0x4] sm:$0xf] %vm250, %v247
    %v253 = vld [vmem:[#allocation2] sm:$0xf]
    %v254 = vld [vmem:[#allocation2 + $0x8] sm:$0xf]
    %257 = vrot.lane.b32.xlu0 %v253, 127
    %v258 = vpop.permute.xlu0 %257
    %259 = vrot.lane.b32.xlu0 %v254, 127
    %v260 = vpop.permute.xlu0 %259
    %263 = vst.msk [vmem:[#allocation3 + $0x8] sm:$0xf] %vm217, %v258
    %264 = vst.msk [vmem:[#allocation3 + $0xc] sm:$0xf] %vm217, %v260
    %v265 = vld [vmem:[#allocation2] sm:$0xff]
    %v266 = vld [vmem:[#allocation2 + $0x8] sm:$0xff]
    %269 = vrot.lane.b32.xlu0 %v265, 109
    %v270 = vpop.permute.xlu0 %269
    %271 = vrot.lane.b32.xlu0 %v266, 109
    %v272 = vpop.permute.xlu0 %271
    %v273 = vrot.slane %v270, 4
    %v274 = vrot.slane %v272, 4
    %vm275 = vcmask 891904
    %v276 = vsel %vm275, %v270, %v273
    %v277 = vsel %vm275, %v272, %v274
    %280 = vst.msk [vmem:[#allocation3 + $0x8] sm:$0xf] %vm250, %v276
    %281 = vst.msk [vmem:[#allocation3 + $0xc] sm:$0xf] %vm250, %v277
    %v282 = vld [vmem:[#allocation2] sm:$0xf]
    %v283 = vld [vmem:[#allocation2 + $0x8] sm:$0xf]
    %v284 = vsel %vm63, 1, 0
    %vm285 = vcmp.eq.s32.totalorder %v284, 1
    %vm286 = vmpackc.low %vm285, %vm285
    %v287 = vsel %vm286, 65537, 0
    %288 = vrot.lane.b32.xlu0 %v287, 2
    %v289 = vpop.permute.xlu0 %288
    %v290 = vunpack.c.l.b16 %v289
    %v291 = vunpack.c.h.b16 %v289
    %v292 = vunpack.c.l.b16 0
    %v293 = vunpack.c.h.b16 0
    %vm294 = vcmp.ne.s32.totalorder %v290, %v292
    %vm295 = vcmp.ne.s32.totalorder %v291, %v293
    %vm296 = vmpackc.low %vm295, %vm294
    %v297 = vsel %vm296, %v282, 0
    %v298 = vsel %vm296, %v283, 0
    %301 = vrot.lane.b32.xlu0 %v297, 126
    %v302 = vpop.permute.xlu0 %301
    %303 = vrot.lane.b32.xlu0 %v298, 126
    %v304 = vpop.permute.xlu0 %303
    %307 = vst.msk [vmem:[#allocation3 + $0x10] sm:$0xf] %vm217, %v302
    %308 = vst.msk [vmem:[#allocation3 + $0x14] sm:$0xf] %vm217, %v304
    %v309 = vld [vmem:[#allocation2] sm:$0xff]
    %v310 = vld [vmem:[#allocation2 + $0x8] sm:$0xff]
    %311 = vrot.lane.b32.xlu0 %v287, 84
    %v312 = vpop.permute.xlu0 %311
    %v313 = vrot.slane %v312, 4
    %vm314 = vcmask 687104
    %v315 = vsel %vm314, %v313, %v312
    %v316 = vunpack.c.l.b16 %v315
    %v317 = vunpack.c.h.b16 %v315
    %v318 = vunpack.c.l.b16 0
    %v319 = vunpack.c.h.b16 0
    %vm320 = vcmp.ne.s32.totalorder %v316, %v318
    %vm321 = vcmp.ne.s32.totalorder %v317, %v319
    %vm322 = vmpackc.low %vm321, %vm320
    %v323 = vsel %vm322, %v309, 0
    %v324 = vsel %vm322, %v310, 0
    %327 = vrot.lane.b32.xlu0 %v323, 108
    %v328 = vpop.permute.xlu0 %327
    %329 = vrot.lane.b32.xlu0 %v324, 108
    %v330 = vpop.permute.xlu0 %329
    %v331 = vrot.slane %v328, 4
    %v332 = vrot.slane %v330, 4
    %vm333 = vcmask 883712
    %v334 = vsel %vm333, %v328, %v331
    %v335 = vsel %vm333, %v330, %v332
    %338 = vst.msk [vmem:[#allocation3 + $0x10] sm:$0xf] %vm250, %v334
    %339 = vst.msk [vmem:[#allocation3 + $0x14] sm:$0xf] %vm250, %v335
    %v340 = vld [vmem:[#allocation2] sm:$0xf]
    %v341 = vld [vmem:[#allocation2 + $0x8] sm:$0xf]
    %342 = vrot.lane.b32.xlu0 %v222, 8
    %v343 = vpop.permute.xlu0 %342
    %v344 = vunpack.c.l.b16 %v343
    %v345 = vunpack.c.h.b16 %v343
    %v346 = vunpack.c.l.b16 0
    %v347 = vunpack.c.h.b16 0
    %vm348 = vcmp.ne.s32.totalorder %v344, %v346
    %vm349 = vcmp.ne.s32.totalorder %v345, %v347
    %vm350 = vmpackc.low %vm349, %vm348
    %v351 = vsel %vm350, %v340, 0
    %v352 = vsel %vm350, %v341, 0
    %355 = vrot.lane.b32.xlu0 %v351, 120
    %v356 = vpop.permute.xlu0 %355
    %357 = vrot.lane.b32.xlu0 %v352, 120
    %v358 = vpop.permute.xlu0 %357
    %361 = vst.msk [vmem:[#allocation3 + $0x18] sm:$0xf] %vm217, %v356
    %362 = vst.msk [vmem:[#allocation3 + $0x1c] sm:$0xf] %vm217, %v358
    %v363 = vld [vmem:[#allocation2] sm:$0xff]
    %v364 = vld [vmem:[#allocation2 + $0x8] sm:$0xff]
    %365 = vrot.lane.b32.xlu0 %v222, 90
    %v366 = vpop.permute.xlu0 %365
    %v367 = vrot.slane %v366, 4
    %vm368 = vcmask 736256
    %v369 = vsel %vm368, %v367, %v366
    %v370 = vunpack.c.l.b16 %v369
    %v371 = vunpack.c.h.b16 %v369
    %v372 = vunpack.c.l.b16 0
    %v373 = vunpack.c.h.b16 0
    %vm374 = vcmp.ne.s32.totalorder %v370, %v372
    %vm375 = vcmp.ne.s32.totalorder %v371, %v373
    %vm376 = vmpackc.low %vm375, %vm374
    %v377 = vsel %vm376, %v363, 0
    %v378 = vsel %vm376, %v364, 0
    %381 = vrot.lane.b32.xlu0 %v377, 102
    %v382 = vpop.permute.xlu0 %381
    %383 = vrot.lane.b32.xlu0 %v378, 102
    %v384 = vpop.permute.xlu0 %383
    %v385 = vrot.slane %v382, 4
    %v386 = vrot.slane %v384, 4
    %vm387 = vcmask 834560
    %v388 = vsel %vm387, %v382, %v385
    %v389 = vsel %vm387, %v384, %v386
    %392 = vst.msk [vmem:[#allocation3 + $0x18] sm:$0xf] %vm250, %v388
    %393 = vst.msk [vmem:[#allocation3 + $0x1c] sm:$0xf] %vm250, %v389
    %v394 = vld [vmem:[#allocation2] sm:$0xf]
    %v395 = vld [vmem:[#allocation2 + $0x8] sm:$0xf]
    %398 = vrot.lane.b32.xlu0 %v394, 119
    %v399 = vpop.permute.xlu0 %398
    %400 = vrot.lane.b32.xlu0 %v395, 119
    %v401 = vpop.permute.xlu0 %400
    %404 = vst.msk [vmem:[#allocation3 + $0x20] sm:$0xf] %vm217, %v399
    %405 = vst.msk [vmem:[#allocation3 + $0x24] sm:$0xf] %vm217, %v401
    %v406 = vld [vmem:[#allocation2] sm:$0xff]
    %v407 = vld [vmem:[#allocation2 + $0x8] sm:$0xff]
    %410 = vrot.lane.b32.xlu0 %v406, 101
    %v411 = vpop.permute.xlu0 %410
    %412 = vrot.lane.b32.xlu0 %v407, 101
    %v413 = vpop.permute.xlu0 %412
    %v414 = vrot.slane %v411, 4
    %v415 = vrot.slane %v413, 4
    %vm416 = vcmask 826368
    %v417 = vsel %vm416, %v411, %v414
    %v418 = vsel %vm416, %v413, %v415
    %421 = vst.msk [vmem:[#allocation3 + $0x20] sm:$0xf] %vm250, %v417
    %422 = vst.msk [vmem:[#allocation3 + $0x24] sm:$0xf] %vm250, %v418
    %v423 = vld [vmem:[#allocation2] sm:$0xf]
    %v424 = vld [vmem:[#allocation2 + $0x8] sm:$0xf]
    %425 = vrot.lane.b32.xlu0 %v287, 10
    %v426 = vpop.permute.xlu0 %425
    %v427 = vunpack.c.l.b16 %v426
    %v428 = vunpack.c.h.b16 %v426
    %v429 = vunpack.c.l.b16 0
    %v430 = vunpack.c.h.b16 0
    %vm431 = vcmp.ne.s32.totalorder %v427, %v429
    %vm432 = vcmp.ne.s32.totalorder %v428, %v430
    %vm433 = vmpackc.low %vm432, %vm431
    %v434 = vsel %vm433, %v423, 0
    %v435 = vsel %vm433, %v424, 0
    %438 = vrot.lane.b32.xlu0 %v434, 118
    %v439 = vpop.permute.xlu0 %438
    %440 = vrot.lane.b32.xlu0 %v435, 118
    %v441 = vpop.permute.xlu0 %440
    %444 = vst.msk [vmem:[#allocation3 + $0x28] sm:$0xf] %vm217, %v439
    %445 = vst.msk [vmem:[#allocation3 + $0x2c] sm:$0xf] %vm217, %v441
    %v446 = vld [vmem:[#allocation2] sm:$0xff]
    %v447 = vld [vmem:[#allocation2 + $0x8] sm:$0xff]
    %448 = vrot.lane.b32.xlu0 %v287, 92
    %v449 = vpop.permute.xlu0 %448
    %v450 = vrot.slane %v449, 4
    %vm451 = vcmask 752640
    %v452 = vsel %vm451, %v450, %v449
    %v453 = vunpack.c.l.b16 %v452
    %v454 = vunpack.c.h.b16 %v452
    %v455 = vunpack.c.l.b16 0
    %v456 = vunpack.c.h.b16 0
    %vm457 = vcmp.ne.s32.totalorder %v453, %v455
    %vm458 = vcmp.ne.s32.totalorder %v454, %v456
    %vm459 = vmpackc.low %vm458, %vm457
    %v460 = vsel %vm459, %v446, 0
    %v461 = vsel %vm459, %v447, 0
    %464 = vrot.lane.b32.xlu0 %v460, 100
    %v465 = vpop.permute.xlu0 %464
    %466 = vrot.lane.b32.xlu0 %v461, 100
    %v467 = vpop.permute.xlu0 %466
    %v468 = vrot.slane %v465, 4
    %v469 = vrot.slane %v467, 4
    %vm470 = vcmask 818176
    %v471 = vsel %vm470, %v465, %v468
    %v472 = vsel %vm470, %v467, %v469
    %475 = vst.msk [vmem:[#allocation3 + $0x28] sm:$0xf] %vm250, %v471
    %476 = vst.msk [vmem:[#allocation3 + $0x2c] sm:$0xf] %vm250, %v472
    %v477 = vld [vmem:[#allocation2] sm:$0xf]
    %v478 = vld [vmem:[#allocation2 + $0x8] sm:$0xf]
    %479 = vrot.lane.b32.xlu0 %v222, 16
    %v480 = vpop.permute.xlu0 %479
    %v481 = vunpack.c.l.b16 %v480
    %v482 = vunpack.c.h.b16 %v480
    %v483 = vunpack.c.l.b16 0
    %v484 = vunpack.c.h.b16 0
    %vm485 = vcmp.ne.s32.totalorder %v481, %v483
    %vm486 = vcmp.ne.s32.totalorder %v482, %v484
    %vm487 = vmpackc.low %vm486, %vm485
    %v488 = vsel %vm487, %v477, 0
    %v489 = vsel %vm487, %v478, 0
    %492 = vrot.lane.b32.xlu0 %v488, 112
    %v493 = vpop.permute.xlu0 %492
    %494 = vrot.lane.b32.xlu0 %v489, 112
    %v495 = vpop.permute.xlu0 %494
    %498 = vst.msk [vmem:[#allocation3 + $0x30] sm:$0xf] %vm217, %v493
    %499 = vst.msk [vmem:[#allocation3 + $0x34] sm:$0xf] %vm217, %v495
    %v500 = vld [vmem:[#allocation2] sm:$0xff]
    %v501 = vld [vmem:[#allocation2 + $0x8] sm:$0xff]
    %502 = vrot.lane.b32.xlu0 %v222, 98
    %v503 = vpop.permute.xlu0 %502
    %v504 = vrot.slane %v503, 4
    %vm505 = vcmask 801792
    %v506 = vsel %vm505, %v504, %v503
    %v507 = vunpack.c.l.b16 %v506
    %v508 = vunpack.c.h.b16 %v506
    %v509 = vunpack.c.l.b16 0
    %v510 = vunpack.c.h.b16 0
    %vm511 = vcmp.ne.s32.totalorder %v507, %v509
    %vm512 = vcmp.ne.s32.totalorder %v508, %v510
    %vm513 = vmpackc.low %vm512, %vm511
    %v514 = vsel %vm513, %v500, 0
    %v515 = vsel %vm513, %v501, 0
    %518 = vrot.lane.b32.xlu0 %v514, 94
    %v519 = vpop.permute.xlu0 %518
    %520 = vrot.lane.b32.xlu0 %v515, 94
    %v521 = vpop.permute.xlu0 %520
    %v522 = vrot.slane %v519, 4
    %v523 = vrot.slane %v521, 4
    %vm524 = vcmask 769024
    %v525 = vsel %vm524, %v519, %v522
    %v526 = vsel %vm524, %v521, %v523
    %529 = vst.msk [vmem:[#allocation3 + $0x30] sm:$0xf] %vm250, %v525
    %530 = vst.msk [vmem:[#allocation3 + $0x34] sm:$0xf] %vm250, %v526
    %v531 = vld [vmem:[#allocation2] sm:$0xf]
    %v532 = vld [vmem:[#allocation2 + $0x8] sm:$0xf]
    %535 = vrot.lane.b32.xlu0 %v531, 111
    %v536 = vpop.permute.xlu0 %535
    %537 = vrot.lane.b32.xlu0 %v532, 111
    %v538 = vpop.permute.xlu0 %537
    %541 = vst.msk [vmem:[#allocation3 + $0x38] sm:$0xf] %vm217, %v536
    %542 = vst.msk [vmem:[#allocation3 + $0x3c] sm:$0xf] %vm217, %v538
    %v543 = vld [vmem:[#allocation2] sm:$0xff]
    %v544 = vld [vmem:[#allocation2 + $0x8] sm:$0xff]
    %547 = vrot.lane.b32.xlu0 %v543, 93
    %v548 = vpop.permute.xlu0 %547
    %549 = vrot.lane.b32.xlu0 %v544, 93
    %v550 = vpop.permute.xlu0 %549
    %v551 = vrot.slane %v548, 4
    %v552 = vrot.slane %v550, 4
    %vm553 = vcmask 760832
    %v554 = vsel %vm553, %v548, %v551
    %v555 = vsel %vm553, %v550, %v552
    %558 = vst.msk [vmem:[#allocation3 + $0x38] sm:$0xf] %vm250, %v554
    %559 = vst.msk [vmem:[#allocation3 + $0x3c] sm:$0xf] %vm250, %v555
    %v560 = vld [vmem:[#allocation2] sm:$0xf]
    %v561 = vld [vmem:[#allocation2 + $0x8] sm:$0xf]
    %562 = vrot.lane.b32.xlu0 %v287, 18
    %v563 = vpop.permute.xlu0 %562
    %v564 = vunpack.c.l.b16 %v563
    %v565 = vunpack.c.h.b16 %v563
    %v566 = vunpack.c.l.b16 0
    %v567 = vunpack.c.h.b16 0
    %vm568 = vcmp.ne.s32.totalorder %v564, %v566
    %vm569 = vcmp.ne.s32.totalorder %v565, %v567
    %vm570 = vmpackc.low %vm569, %vm568
    %v571 = vsel %vm570, %v560, 0
    %v572 = vsel %vm570, %v561, 0
    %575 = vrot.lane.b32.xlu0 %v571, 110
    %v576 = vpop.permute.xlu0 %575
    %577 = vrot.lane.b32.xlu0 %v572, 110
    %v578 = vpop.permute.xlu0 %577
    %581 = vst.msk [vmem:[#allocation3 + $0x40] sm:$0xf] %vm217, %v576
    %582 = vst.msk [vmem:[#allocation3 + $0x44] sm:$0xf] %vm217, %v578
    %v583 = vld [vmem:[#allocation2] sm:$0xff]
    %v584 = vld [vmem:[#allocation2 + $0x8] sm:$0xff]
    %585 = vrot.lane.b32.xlu0 %v287, 100
    %v586 = vpop.permute.xlu0 %585
    %v587 = vrot.slane %v586, 4
    %v588 = vsel %vm470, %v587, %v586
    %v589 = vunpack.c.l.b16 %v588
    %v590 = vunpack.c.h.b16 %v588
    %v591 = vunpack.c.l.b16 0
    %v592 = vunpack.c.h.b16 0
    %vm593 = vcmp.ne.s32.totalorder %v589, %v591
    %vm594 = vcmp.ne.s32.totalorder %v590, %v592
    %vm595 = vmpackc.low %vm594, %vm593
    %v596 = vsel %vm595, %v583, 0
    %v597 = vsel %vm595, %v584, 0
    %600 = vrot.lane.b32.xlu0 %v596, 92
    %v601 = vpop.permute.xlu0 %600
    %602 = vrot.lane.b32.xlu0 %v597, 92
    %v603 = vpop.permute.xlu0 %602
    %v604 = vrot.slane %v601, 4
    %v605 = vrot.slane %v603, 4
    %v606 = vsel %vm451, %v601, %v604
    %v607 = vsel %vm451, %v603, %v605
    %610 = vst.msk [vmem:[#allocation3 + $0x40] sm:$0xf] %vm250, %v606
    %611 = vst.msk [vmem:[#allocation3 + $0x44] sm:$0xf] %vm250, %v607
    %v612 = vld [vmem:[#allocation3] sm:$0xf]
    %v613 = vld [vmem:[#allocation3 + $0x4] sm:$0xf]
    %v614 = vld [vmem:[#allocation3 + $0x8] sm:$0xf]
    %v615 = vld [vmem:[#allocation3 + $0xc] sm:$0xf]
    %v616 = vld [vmem:[#allocation3 + $0x10] sm:$0xf]
    %v617 = vld [vmem:[#allocation3 + $0x14] sm:$0xf]
    %v618 = vld [vmem:[#allocation3 + $0x18] sm:$0xf]
    %v619 = vld [vmem:[#allocation3 + $0x1c] sm:$0xf]
    %v620 = vld [vmem:[#allocation3 + $0x20] sm:$0xf]
    %v621 = vld [vmem:[#allocation3 + $0x24] sm:$0xf]
    %v622 = vld [vmem:[#allocation3 + $0x28] sm:$0xf]
    %v623 = vld [vmem:[#allocation3 + $0x2c] sm:$0xf]
    %v624 = vld [vmem:[#allocation3 + $0x30] sm:$0xf]
    %v625 = vld [vmem:[#allocation3 + $0x34] sm:$0xf]
    %v626 = vld [vmem:[#allocation3 + $0x38] sm:$0xf]
    %v627 = vld [vmem:[#allocation3 + $0x3c] sm:$0xf]
    %v628 = vld [vmem:[#allocation3 + $0x40] sm:$0xf]
    %v629 = vld [vmem:[#allocation3 + $0x44] sm:$0xf]
    %v632 = vunpack.c.l.b16 %v179
    %v633 = vunpack.c.h.b16 %v179
    %v634 = vunpack.c.l.b16 %v180
    %v635 = vunpack.c.h.b16 %v180
    %v636 = vpack.c.b16 %v634, %v632
    %v637 = vpack.c.b16 %v635, %v633
    %v657 = vunpack.c.l.b16 %v612
    %v658 = vunpack.c.l.b16 %v613
    %v659 = vunpack.c.l.b16 %v614
    %v660 = vunpack.c.l.b16 %v615
    %v661 = vunpack.c.l.b16 %v616
    %v662 = vunpack.c.l.b16 %v617
    %v663 = vunpack.c.l.b16 %v618
    %v664 = vunpack.c.l.b16 %v619
    %v665 = vunpack.c.l.b16 %v620
    %v666 = vunpack.c.l.b16 %v621
    %v667 = vunpack.c.l.b16 %v622
    %v668 = vunpack.c.l.b16 %v623
    %v669 = vunpack.c.l.b16 %v624
    %v670 = vunpack.c.l.b16 %v625
    %v671 = vunpack.c.l.b16 %v626
    %v672 = vunpack.c.l.b16 %v627
    %v673 = vunpack.c.l.b16 %v628
    %v674 = vunpack.c.l.b16 %v629
    %v675 = vpack.c.b16 %v658, %v657
    %v676 = vpack.c.b16 %v660, %v659
    %v677 = vpack.c.b16 %v662, %v661
    %v678 = vpack.c.b16 %v664, %v663
    %v679 = vpack.c.b16 %v666, %v665
    %v680 = vpack.c.b16 %v668, %v667
    %v681 = vpack.c.b16 %v670, %v669
    %v682 = vpack.c.b16 %v672, %v671
    %v683 = vpack.c.b16 %v674, %v673
    %v694 = vsel %vm123, %v637, 0
    %696 = vmatpush.bf16.msra.mxu0 %v682
    %697 = vmatpush.bf16.msra.mxu0 %v681
    %698 = vmatpush.bf16.msra.mxu0 %v680
    %699 = vmatpush.bf16.msra.mxu0 %v679
    %700 = vmatpush.bf16.msra.mxu0 %v678
    %701 = vmatpush.bf16.msra.mxu0 %v677
    %702 = vmatpush.bf16.msra.mxu0 %v676
    %703 = vmatpush.bf16.msra.mxu0 %v675
    %704 = vmatmul.bf16.gmra.mxu0 %v636
    %v705 = vpop.f32.mrf.mxu0
    %v706 = vadd.f32 0.0, %v705
    %v707 = vpop.f32.mrf.mxu0
    %v708 = vadd.f32 0.0, %v707
    %709 = vdwg.mxu0
    %710 = vmatpush.bf16.msra.mxu0 0
    %711 = vmatpush.bf16.msra.mxu0 0
    %712 = vmatpush.bf16.msra.mxu0 0
    %713 = vmatpush.bf16.msra.mxu0 0
    %714 = vmatpush.bf16.msra.mxu0 0
    %715 = vmatpush.bf16.msra.mxu0 0
    %716 = vmatpush.bf16.msra.mxu0 0
    %717 = vmatpush.bf16.msra.mxu0 %v683
    %718 = vmatmul.bf16.gmra.mxu0 %v694
    %v719 = vpop.f32.mrf.mxu0
    %v720 = vadd.f32 %v706, %v719
    %v721 = vpop.f32.mrf.mxu0
    %v722 = vadd.f32 %v708, %v721
    %723 = vdwg.mxu0
    %v724 = vld [vmem:[%s4] sm:$0xff]
    %v725 = vld [vmem:[%s4 + $0x8] sm:$0xff]
    %v726 = vld [vmem:[%s5] sm:$0xff]
    %v727 = vld [vmem:[%s5 + $0x8] sm:$0xff]
    %729 = vset.pattern.permute.xlu0 0
    %730 = vperm.xlu0 %729, %v724
    %v731 = vpop.permute.xlu0 %730
    %734 = vset.pattern.permute.xlu0 0
    %735 = vperm.xlu0 %734, %v725
    %v736 = vpop.permute.xlu0 %735
    %v738 = vmul.f32 %v720, %v731
    %v739 = vmul.f32 %v722, %v736
    %741 = vset.pattern.permute.xlu0 0
    %742 = vperm.xlu0 %741, %v726
    %v743 = vpop.permute.xlu0 %742
    %746 = vset.pattern.permute.xlu0 0
    %747 = vperm.xlu0 %746, %v727
    %v748 = vpop.permute.xlu0 %747
    %v750 = vadd.f32 %v738, %v743
    %v751 = vadd.f32 %v739, %v748
    %v752 = vmax.f32 %v750, 0.0
    %v753 = vmax.f32 %v751, 0.0
    %v754 = vld [vmem:[%s6] sm:$0xff]
    %v755 = vpack.c.bf16 %v752, %v752
    %v756 = vpack.c.bf16 %v753, %v753
    %759 = vrot.lane.b32.xlu0 %v755, 9
    %v760 = vpop.permute.xlu0 %759
    %761 = vrot.lane.b32.xlu0 %v756, 9
    %v762 = vpop.permute.xlu0 %761
    %765 = vst.msk [vmem:[#allocation2] sm:$0xf] %vm191, %v760
    %766 = vst.msk [vmem:[#allocation2 + $0x8] sm:$0xf] %vm191, %v762
    %767 = vrot.lane.b32.xlu0 %v755, 27
    %v768 = vpop.permute.xlu0 %767
    %769 = vrot.lane.b32.xlu0 %v756, 27
    %v770 = vpop.permute.xlu0 %769
    %v771 = vrot.slane %v768, 4
    %v772 = vrot.slane %v770, 4
    %v773 = vsel %vm200, %v771, %v768
    %v774 = vsel %vm200, %v772, %v770
    %777 = vst.msk [vmem:[#allocation2] sm:$0xff] %vm207, %v773
    %778 = vst.msk [vmem:[#allocation2 + $0x8] sm:$0xff] %vm207, %v774
    %v779 = vld [vmem:[#allocation2] sm:$0xf]
    %v780 = vld [vmem:[#allocation2 + $0x8] sm:$0xf]
    %v781 = vsel %vm214, %v779, 0
    %v782 = vsel %vm214, %v780, 0
    %783 = vst.msk [vmem:[#allocation3] sm:$0xf] %vm217, %v781
    %784 = vst.msk [vmem:[#allocation3 + $0x4] sm:$0xf] %vm217, %v782
    %v785 = vld [vmem:[#allocation2] sm:$0xff]
    %v786 = vld [vmem:[#allocation2 + $0x8] sm:$0xff]
    %v787 = vsel %vm234, %v785, 0
    %v788 = vsel %vm234, %v786, 0
    %791 = vrot.lane.b32.xlu0 %v787, 110
    %v792 = vpop.permute.xlu0 %791
    %793 = vrot.lane.b32.xlu0 %v788, 110
    %v794 = vpop.permute.xlu0 %793
    %v795 = vrot.slane %v792, 4
    %v796 = vrot.slane %v794, 4
    %v797 = vsel %vm245, %v792, %v795
    %v798 = vsel %vm245, %v794, %v796
    %801 = vst.msk [vmem:[#allocation3] sm:$0xf] %vm250, %v797
    %802 = vst.msk [vmem:[#allocation3 + $0x4] sm:$0xf] %vm250, %v798
    %v803 = vld [vmem:[#allocation2] sm:$0xf]
    %v804 = vld [vmem:[#allocation2 + $0x8] sm:$0xf]
    %807 = vrot.lane.b32.xlu0 %v803, 127
    %v808 = vpop.permute.xlu0 %807
    %809 = vrot.lane.b32.xlu0 %v804, 127
    %v810 = vpop.permute.xlu0 %809
    %813 = vst.msk [vmem:[#allocation3 + $0x8] sm:$0xf] %vm217, %v808
    %814 = vst.msk [vmem:[#allocation3 + $0xc] sm:$0xf] %vm217, %v810
    %v815 = vld [vmem:[#allocation2] sm:$0xff]
    %v816 = vld [vmem:[#allocation2 + $0x8] sm:$0xff]
    %819 = vrot.lane.b32.xlu0 %v815, 109
    %v820 = vpop.permute.xlu0 %819
    %821 = vrot.lane.b32.xlu0 %v816, 109
    %v822 = vpop.permute.xlu0 %821
    %v823 = vrot.slane %v820, 4
    %v824 = vrot.slane %v822, 4
    %v825 = vsel %vm275, %v820, %v823
    %v826 = vsel %vm275, %v822, %v824
    %829 = vst.msk [vmem:[#allocation3 + $0x8] sm:$0xf] %vm250, %v825
    %830 = vst.msk [vmem:[#allocation3 + $0xc] sm:$0xf] %vm250, %v826
    %v831 = vld [vmem:[#allocation2] sm:$0xf]
    %v832 = vld [vmem:[#allocation2 + $0x8] sm:$0xf]
    %v833 = vsel %vm296, %v831, 0
    %v834 = vsel %vm296, %v832, 0
    %837 = vrot.lane.b32.xlu0 %v833, 126
    %v838 = vpop.permute.xlu0 %837
    %839 = vrot.lane.b32.xlu0 %v834, 126
    %v840 = vpop.permute.xlu0 %839
    %843 = vst.msk [vmem:[#allocation3 + $0x10] sm:$0xf] %vm217, %v838
    %844 = vst.msk [vmem:[#allocation3 + $0x14] sm:$0xf] %vm217, %v840
    %v845 = vld [vmem:[#allocation2] sm:$0xff]
    %v846 = vld [vmem:[#allocation2 + $0x8] sm:$0xff]
    %v847 = vsel %vm322, %v845, 0
    %v848 = vsel %vm322, %v846, 0
    %851 = vrot.lane.b32.xlu0 %v847, 108
    %v852 = vpop.permute.xlu0 %851
    %853 = vrot.lane.b32.xlu0 %v848, 108
    %v854 = vpop.permute.xlu0 %853
    %v855 = vrot.slane %v852, 4
    %v856 = vrot.slane %v854, 4
    %v857 = vsel %vm333, %v852, %v855
    %v858 = vsel %vm333, %v854, %v856
    %861 = vst.msk [vmem:[#allocation3 + $0x10] sm:$0xf] %vm250, %v857
    %862 = vst.msk [vmem:[#allocation3 + $0x14] sm:$0xf] %vm250, %v858
    %v863 = vld [vmem:[#allocation2] sm:$0xf]
    %v864 = vld [vmem:[#allocation2 + $0x8] sm:$0xf]
    %v865 = vsel %vm350, %v863, 0
    %v866 = vsel %vm350, %v864, 0
    %869 = vrot.lane.b32.xlu0 %v865, 120
    %v870 = vpop.permute.xlu0 %869
    %871 = vrot.lane.b32.xlu0 %v866, 120
    %v872 = vpop.permute.xlu0 %871
    %875 = vst.msk [vmem:[#allocation3 + $0x18] sm:$0xf] %vm217, %v870
    %876 = vst.msk [vmem:[#allocation3 + $0x1c] sm:$0xf] %vm217, %v872
    %v877 = vld [vmem:[#allocation2] sm:$0xff]
    %v878 = vld [vmem:[#allocation2 + $0x8] sm:$0xff]
    %v879 = vsel %vm376, %v877, 0
    %v880 = vsel %vm376, %v878, 0
    %883 = vrot.lane.b32.xlu0 %v879, 102
    %v884 = vpop.permute.xlu0 %883
    %885 = vrot.lane.b32.xlu0 %v880, 102
    %v886 = vpop.permute.xlu0 %885
    %v887 = vrot.slane %v884, 4
    %v888 = vrot.slane %v886, 4
    %v889 = vsel %vm387, %v884, %v887
    %v890 = vsel %vm387, %v886, %v888
    %893 = vst.msk [vmem:[#allocation3 + $0x18] sm:$0xf] %vm250, %v889
    %894 = vst.msk [vmem:[#allocation3 + $0x1c] sm:$0xf] %vm250, %v890
    %v895 = vld [vmem:[#allocation2] sm:$0xf]
    %v896 = vld [vmem:[#allocation2 + $0x8] sm:$0xf]
    %899 = vrot.lane.b32.xlu0 %v895, 119
    %v900 = vpop.permute.xlu0 %899
    %901 = vrot.lane.b32.xlu0 %v896, 119
    %v902 = vpop.permute.xlu0 %901
    %905 = vst.msk [vmem:[#allocation3 + $0x20] sm:$0xf] %vm217, %v900
    %906 = vst.msk [vmem:[#allocation3 + $0x24] sm:$0xf] %vm217, %v902
    %v907 = vld [vmem:[#allocation2] sm:$0xff]
    %v908 = vld [vmem:[#allocation2 + $0x8] sm:$0xff]
    %911 = vrot.lane.b32.xlu0 %v907, 101
    %v912 = vpop.permute.xlu0 %911
    %913 = vrot.lane.b32.xlu0 %v908, 101
    %v914 = vpop.permute.xlu0 %913
    %v915 = vrot.slane %v912, 4
    %v916 = vrot.slane %v914, 4
    %v917 = vsel %vm416, %v912, %v915
    %v918 = vsel %vm416, %v914, %v916
    %921 = vst.msk [vmem:[#allocation3 + $0x20] sm:$0xf] %vm250, %v917
    %922 = vst.msk [vmem:[#allocation3 + $0x24] sm:$0xf] %vm250, %v918
    %v923 = vld [vmem:[#allocation2] sm:$0xf]
    %v924 = vld [vmem:[#allocation2 + $0x8] sm:$0xf]
    %v925 = vsel %vm433, %v923, 0
    %v926 = vsel %vm433, %v924, 0
    %929 = vrot.lane.b32.xlu0 %v925, 118
    %v930 = vpop.permute.xlu0 %929
    %931 = vrot.lane.b32.xlu0 %v926, 118
    %v932 = vpop.permute.xlu0 %931
    %935 = vst.msk [vmem:[#allocation3 + $0x28] sm:$0xf] %vm217, %v930
    %936 = vst.msk [vmem:[#allocation3 + $0x2c] sm:$0xf] %vm217, %v932
    %v937 = vld [vmem:[#allocation2] sm:$0xff]
    %v938 = vld [vmem:[#allocation2 + $0x8] sm:$0xff]
    %v939 = vsel %vm459, %v937, 0
    %v940 = vsel %vm459, %v938, 0
    %943 = vrot.lane.b32.xlu0 %v939, 100
    %v944 = vpop.permute.xlu0 %943
    %945 = vrot.lane.b32.xlu0 %v940, 100
    %v946 = vpop.permute.xlu0 %945
    %v947 = vrot.slane %v944, 4
    %v948 = vrot.slane %v946, 4
    %v949 = vsel %vm470, %v944, %v947
    %v950 = vsel %vm470, %v946, %v948
    %953 = vst.msk [vmem:[#allocation3 + $0x28] sm:$0xf] %vm250, %v949
    %954 = vst.msk [vmem:[#allocation3 + $0x2c] sm:$0xf] %vm250, %v950
    %v955 = vld [vmem:[#allocation2] sm:$0xf]
    %v956 = vld [vmem:[#allocation2 + $0x8] sm:$0xf]
    %v957 = vsel %vm487, %v955, 0
    %v958 = vsel %vm487, %v956, 0
    %961 = vrot.lane.b32.xlu0 %v957, 112
    %v962 = vpop.permute.xlu0 %961
    %963 = vrot.lane.b32.xlu0 %v958, 112
    %v964 = vpop.permute.xlu0 %963
    %967 = vst.msk [vmem:[#allocation3 + $0x30] sm:$0xf] %vm217, %v962
    %968 = vst.msk [vmem:[#allocation3 + $0x34] sm:$0xf] %vm217, %v964
    %v969 = vld [vmem:[#allocation2] sm:$0xff]
    %v970 = vld [vmem:[#allocation2 + $0x8] sm:$0xff]
    %v971 = vsel %vm513, %v969, 0
    %v972 = vsel %vm513, %v970, 0
    %975 = vrot.lane.b32.xlu0 %v971, 94
    %v976 = vpop.permute.xlu0 %975
    %977 = vrot.lane.b32.xlu0 %v972, 94
    %v978 = vpop.permute.xlu0 %977
    %v979 = vrot.slane %v976, 4
    %v980 = vrot.slane %v978, 4
    %v981 = vsel %vm524, %v976, %v979
    %v982 = vsel %vm524, %v978, %v980
    %985 = vst.msk [vmem:[#allocation3 + $0x30] sm:$0xf] %vm250, %v981
    %986 = vst.msk [vmem:[#allocation3 + $0x34] sm:$0xf] %vm250, %v982
    %v987 = vld [vmem:[#allocation2] sm:$0xf]
    %v988 = vld [vmem:[#allocation2 + $0x8] sm:$0xf]
    %991 = vrot.lane.b32.xlu0 %v987, 111
    %v992 = vpop.permute.xlu0 %991
    %993 = vrot.lane.b32.xlu0 %v988, 111
    %v994 = vpop.permute.xlu0 %993
    %997 = vst.msk [vmem:[#allocation3 + $0x38] sm:$0xf] %vm217, %v992
    %998 = vst.msk [vmem:[#allocation3 + $0x3c] sm:$0xf] %vm217, %v994
    %v999 = vld [vmem:[#allocation2] sm:$0xff]
    %v1000 = vld [vmem:[#allocation2 + $0x8] sm:$0xff]
    %1003 = vrot.lane.b32.xlu0 %v999, 93
    %v1004 = vpop.permute.xlu0 %1003
    %1005 = vrot.lane.b32.xlu0 %v1000, 93
    %v1006 = vpop.permute.xlu0 %1005
    %v1007 = vrot.slane %v1004, 4
    %v1008 = vrot.slane %v1006, 4
    %v1009 = vsel %vm553, %v1004, %v1007
    %v1010 = vsel %vm553, %v1006, %v1008
    %1013 = vst.msk [vmem:[#allocation3 + $0x38] sm:$0xf] %vm250, %v1009
    %1014 = vst.msk [vmem:[#allocation3 + $0x3c] sm:$0xf] %vm250, %v1010
    %v1015 = vld [vmem:[#allocation2] sm:$0xf]
    %v1016 = vld [vmem:[#allocation2 + $0x8] sm:$0xf]
    %v1017 = vsel %vm570, %v1015, 0
    %v1018 = vsel %vm570, %v1016, 0
    %1021 = vrot.lane.b32.xlu0 %v1017, 110
    %v1022 = vpop.permute.xlu0 %1021
    %1023 = vrot.lane.b32.xlu0 %v1018, 110
    %v1024 = vpop.permute.xlu0 %1023
    %1027 = vst.msk [vmem:[#allocation3 + $0x40] sm:$0xf] %vm217, %v1022
    %1028 = vst.msk [vmem:[#allocation3 + $0x44] sm:$0xf] %vm217, %v1024
    %v1029 = vld [vmem:[#allocation2] sm:$0xff]
    %v1030 = vld [vmem:[#allocation2 + $0x8] sm:$0xff]
    %v1031 = vsel %vm595, %v1029, 0
    %v1032 = vsel %vm595, %v1030, 0
    %1035 = vrot.lane.b32.xlu0 %v1031, 92
    %v1036 = vpop.permute.xlu0 %1035
    %1037 = vrot.lane.b32.xlu0 %v1032, 92
    %v1038 = vpop.permute.xlu0 %1037
    %v1039 = vrot.slane %v1036, 4
    %v1040 = vrot.slane %v1038, 4
    %v1041 = vsel %vm451, %v1036, %v1039
    %v1042 = vsel %vm451, %v1038, %v1040
    %1045 = vst.msk [vmem:[#allocation3 + $0x40] sm:$0xf] %vm250, %v1041
    %1046 = vst.msk [vmem:[#allocation3 + $0x44] sm:$0xf] %vm250, %v1042
    %v1047 = vld [vmem:[#allocation3] sm:$0xf]
    %v1048 = vld [vmem:[#allocation3 + $0x4] sm:$0xf]
    %v1049 = vld [vmem:[#allocation3 + $0x8] sm:$0xf]
    %v1050 = vld [vmem:[#allocation3 + $0xc] sm:$0xf]
    %v1051 = vld [vmem:[#allocation3 + $0x10] sm:$0xf]
    %v1052 = vld [vmem:[#allocation3 + $0x14] sm:$0xf]
    %v1053 = vld [vmem:[#allocation3 + $0x18] sm:$0xf]
    %v1054 = vld [vmem:[#allocation3 + $0x1c] sm:$0xf]
    %v1055 = vld [vmem:[#allocation3 + $0x20] sm:$0xf]
    %v1056 = vld [vmem:[#allocation3 + $0x24] sm:$0xf]
    %v1057 = vld [vmem:[#allocation3 + $0x28] sm:$0xf]
    %v1058 = vld [vmem:[#allocation3 + $0x2c] sm:$0xf]
    %v1059 = vld [vmem:[#allocation3 + $0x30] sm:$0xf]
    %v1060 = vld [vmem:[#allocation3 + $0x34] sm:$0xf]
    %v1061 = vld [vmem:[#allocation3 + $0x38] sm:$0xf]
    %v1062 = vld [vmem:[#allocation3 + $0x3c] sm:$0xf]
    %v1063 = vld [vmem:[#allocation3 + $0x40] sm:$0xf]
    %v1064 = vld [vmem:[#allocation3 + $0x44] sm:$0xf]
    %v1066 = vunpack.c.l.b16 %v754
    %v1067 = vunpack.c.h.b16 %v754
    %v1068 = vpack.c.b16 %v1066, %v1066
    %v1069 = vpack.c.b16 %v1067, %v1067
    %v1089 = vunpack.c.l.b16 %v1047
    %v1090 = vunpack.c.l.b16 %v1048
    %v1091 = vunpack.c.l.b16 %v1049
    %v1092 = vunpack.c.l.b16 %v1050
    %v1093 = vunpack.c.l.b16 %v1051
    %v1094 = vunpack.c.l.b16 %v1052
    %v1095 = vunpack.c.l.b16 %v1053
    %v1096 = vunpack.c.l.b16 %v1054
    %v1097 = vunpack.c.l.b16 %v1055
    %v1098 = vunpack.c.l.b16 %v1056
    %v1099 = vunpack.c.l.b16 %v1057
    %v1100 = vunpack.c.l.b16 %v1058
    %v1101 = vunpack.c.l.b16 %v1059
    %v1102 = vunpack.c.l.b16 %v1060
    %v1103 = vunpack.c.l.b16 %v1061
    %v1104 = vunpack.c.l.b16 %v1062
    %v1105 = vunpack.c.l.b16 %v1063
    %v1106 = vunpack.c.l.b16 %v1064
    %v1107 = vpack.c.b16 %v1090, %v1089
    %v1108 = vpack.c.b16 %v1092, %v1091
    %v1109 = vpack.c.b16 %v1094, %v1093
    %v1110 = vpack.c.b16 %v1096, %v1095
    %v1111 = vpack.c.b16 %v1098, %v1097
    %v1112 = vpack.c.b16 %v1100, %v1099
    %v1113 = vpack.c.b16 %v1102, %v1101
    %v1114 = vpack.c.b16 %v1104, %v1103
    %v1115 = vpack.c.b16 %v1106, %v1105
    %v1126 = vsel %vm123, %v1069, 0
    %1128 = vmatpush.bf16.msra.mxu0 %v1114
    %1129 = vmatpush.bf16.msra.mxu0 %v1113
    %1130 = vmatpush.bf16.msra.mxu0 %v1112
    %1131 = vmatpush.bf16.msra.mxu0 %v1111
    %1132 = vmatpush.bf16.msra.mxu0 %v1110
    %1133 = vmatpush.bf16.msra.mxu0 %v1109
    %1134 = vmatpush.bf16.msra.mxu0 %v1108
    %1135 = vmatpush.bf16.msra.mxu0 %v1107
    %1136 = vmatmul.bf16.gmra.mxu0 %v1068
    %v1137 = vpop.f32.mrf.mxu0
    %v1138 = vadd.f32 0.0, %v1137
    %v1139 = vpop.f32.mrf.mxu0
    %1140 = vdwg.mxu0
    %1141 = vmatpush.bf16.msra.mxu0 0
    %1142 = vmatpush.bf16.msra.mxu0 0
    %1143 = vmatpush.bf16.msra.mxu0 0
    %1144 = vmatpush.bf16.msra.mxu0 0
    %1145 = vmatpush.bf16.msra.mxu0 0
    %1146 = vmatpush.bf16.msra.mxu0 0
    %1147 = vmatpush.bf16.msra.mxu0 0
    %1148 = vmatpush.bf16.msra.mxu0 %v1115
    %1149 = vmatmul.bf16.gmra.mxu0 %v1126
    %v1150 = vpop.f32.mrf.mxu0
    %v1151 = vadd.f32 %v1138, %v1150
    %v1152 = vpop.f32.mrf.mxu0
    %1153 = vdwg.mxu0
    %v1154 = vld [vmem:[%s7] sm:$0xff]
    %v1155 = vld [vmem:[%s8] sm:$0xff]
    %1157 = vset.pattern.permute.xlu0 0
    %1158 = vperm.xlu0 %1157, %v1154
    %v1159 = vpop.permute.xlu0 %1158
    %v1161 = vmul.f32 %v1151, %v1159
    %1163 = vset.pattern.permute.xlu0 0
    %1164 = vperm.xlu0 %1163, %v1155
    %v1165 = vpop.permute.xlu0 %1164
    %v1167 = vadd.f32 %v1161, %v1165
    %v1168 = vmax.f32 %v1167, 0.0
    %v1169 = vld [vmem:[%s9] sm:$0xf]
    %v1170 = vpack.c.bf16 %v1168, %v1168
    %1172 = vrot.lane.b32.xlu0 %v1170, 9
    %v1173 = vpop.permute.xlu0 %1172
    %1175 = vst.msk [vmem:[#allocation2] sm:$0xf] %vm191, %v1173
    %1176 = vrot.lane.b32.xlu0 %v1170, 27
    %v1177 = vpop.permute.xlu0 %1176
    %v1178 = vrot.slane %v1177, 4
    %v1179 = vsel %vm200, %v1178, %v1177
    %1181 = vst.msk [vmem:[#allocation2] sm:$0xff] %vm207, %v1179
    %v1182 = vld [vmem:[#allocation2] sm:$0xf]
    %v1183 = vsel %vm214, %v1182, 0
    %1184 = vst.msk [vmem:[#allocation3] sm:$0xf] %vm217, %v1183
    %v1185 = vld [vmem:[#allocation2] sm:$0xff]
    %v1186 = vsel %vm234, %v1185, 0
    %1188 = vrot.lane.b32.xlu0 %v1186, 110
    %v1189 = vpop.permute.xlu0 %1188
    %v1190 = vrot.slane %v1189, 4
    %v1191 = vsel %vm245, %v1189, %v1190
    %1193 = vst.msk [vmem:[#allocation3] sm:$0xf] %vm250, %v1191
    %v1194 = vld [vmem:[#allocation2] sm:$0xf]
    %1196 = vrot.lane.b32.xlu0 %v1194, 127
    %v1197 = vpop.permute.xlu0 %1196
    %1199 = vst.msk [vmem:[#allocation3 + $0x4] sm:$0xf] %vm217, %v1197
    %v1200 = vld [vmem:[#allocation2] sm:$0xff]
    %1202 = vrot.lane.b32.xlu0 %v1200, 109
    %v1203 = vpop.permute.xlu0 %1202
    %v1204 = vrot.slane %v1203, 4
    %v1205 = vsel %vm275, %v1203, %v1204
    %1207 = vst.msk [vmem:[#allocation3 + $0x4] sm:$0xf] %vm250, %v1205
    %v1208 = vld [vmem:[#allocation2] sm:$0xf]
    %v1209 = vsel %vm296, %v1208, 0
    %1211 = vrot.lane.b32.xlu0 %v1209, 126
    %v1212 = vpop.permute.xlu0 %1211
    %1214 = vst.msk [vmem:[#allocation3 + $0x8] sm:$0xf] %vm217, %v1212
    %v1215 = vld [vmem:[#allocation2] sm:$0xff]
    %v1216 = vsel %vm322, %v1215, 0
    %1218 = vrot.lane.b32.xlu0 %v1216, 108
    %v1219 = vpop.permute.xlu0 %1218
    %v1220 = vrot.slane %v1219, 4
    %v1221 = vsel %vm333, %v1219, %v1220
    %1223 = vst.msk [vmem:[#allocation3 + $0x8] sm:$0xf] %vm250, %v1221
    %v1224 = vld [vmem:[#allocation2] sm:$0xf]
    %v1225 = vsel %vm350, %v1224, 0
    %1227 = vrot.lane.b32.xlu0 %v1225, 120
    %v1228 = vpop.permute.xlu0 %1227
    %1230 = vst.msk [vmem:[#allocation3 + $0xc] sm:$0xf] %vm217, %v1228
    %v1231 = vld [vmem:[#allocation2] sm:$0xff]
    %v1232 = vsel %vm376, %v1231, 0
    %1234 = vrot.lane.b32.xlu0 %v1232, 102
    %v1235 = vpop.permute.xlu0 %1234
    %v1236 = vrot.slane %v1235, 4
    %v1237 = vsel %vm387, %v1235, %v1236
    %1239 = vst.msk [vmem:[#allocation3 + $0xc] sm:$0xf] %vm250, %v1237
    %v1240 = vld [vmem:[#allocation2] sm:$0xf]
    %1242 = vrot.lane.b32.xlu0 %v1240, 119
    %v1243 = vpop.permute.xlu0 %1242
    %1245 = vst.msk [vmem:[#allocation3 + $0x10] sm:$0xf] %vm217, %v1243
    %v1246 = vld [vmem:[#allocation2] sm:$0xff]
    %1248 = vrot.lane.b32.xlu0 %v1246, 101
    %v1249 = vpop.permute.xlu0 %1248
    %v1250 = vrot.slane %v1249, 4
    %v1251 = vsel %vm416, %v1249, %v1250
    %1253 = vst.msk [vmem:[#allocation3 + $0x10] sm:$0xf] %vm250, %v1251
    %v1254 = vld [vmem:[#allocation2] sm:$0xf]
    %v1255 = vsel %vm433, %v1254, 0
    %1257 = vrot.lane.b32.xlu0 %v1255, 118
    %v1258 = vpop.permute.xlu0 %1257
    %1260 = vst.msk [vmem:[#allocation3 + $0x14] sm:$0xf] %vm217, %v1258
    %v1261 = vld [vmem:[#allocation2] sm:$0xff]
    %v1262 = vsel %vm459, %v1261, 0
    %1264 = vrot.lane.b32.xlu0 %v1262, 100
    %v1265 = vpop.permute.xlu0 %1264
    %v1266 = vrot.slane %v1265, 4
    %v1267 = vsel %vm470, %v1265, %v1266
    %1269 = vst.msk [vmem:[#allocation3 + $0x14] sm:$0xf] %vm250, %v1267
    %v1270 = vld [vmem:[#allocation2] sm:$0xf]
    %v1271 = vsel %vm487, %v1270, 0
    %1273 = vrot.lane.b32.xlu0 %v1271, 112
    %v1274 = vpop.permute.xlu0 %1273
    %1276 = vst.msk [vmem:[#allocation3 + $0x18] sm:$0xf] %vm217, %v1274
    %v1277 = vld [vmem:[#allocation2] sm:$0xff]
    %v1278 = vsel %vm513, %v1277, 0
    %1280 = vrot.lane.b32.xlu0 %v1278, 94
    %v1281 = vpop.permute.xlu0 %1280
    %v1282 = vrot.slane %v1281, 4
    %v1283 = vsel %vm524, %v1281, %v1282
    %1285 = vst.msk [vmem:[#allocation3 + $0x18] sm:$0xf] %vm250, %v1283
    %v1286 = vld [vmem:[#allocation2] sm:$0xf]
    %1288 = vrot.lane.b32.xlu0 %v1286, 111
    %v1289 = vpop.permute.xlu0 %1288
    %1291 = vst.msk [vmem:[#allocation3 + $0x1c] sm:$0xf] %vm217, %v1289
    %v1292 = vld [vmem:[#allocation2] sm:$0xff]
    %1294 = vrot.lane.b32.xlu0 %v1292, 93
    %v1295 = vpop.permute.xlu0 %1294
    %v1296 = vrot.slane %v1295, 4
    %v1297 = vsel %vm553, %v1295, %v1296
    %1299 = vst.msk [vmem:[#allocation3 + $0x1c] sm:$0xf] %vm250, %v1297
    %v1300 = vld [vmem:[#allocation2] sm:$0xf]
    %v1301 = vsel %vm570, %v1300, 0
    %1303 = vrot.lane.b32.xlu0 %v1301, 110
    %v1304 = vpop.permute.xlu0 %1303
    %1306 = vst.msk [vmem:[#allocation3 + $0x20] sm:$0xf] %vm217, %v1304
    %v1307 = vld [vmem:[#allocation2] sm:$0xff]
    %v1308 = vsel %vm595, %v1307, 0
    %1310 = vrot.lane.b32.xlu0 %v1308, 92
    %v1311 = vpop.permute.xlu0 %1310
    %v1312 = vrot.slane %v1311, 4
    %v1313 = vsel %vm451, %v1311, %v1312
    %1315 = vst.msk [vmem:[#allocation3 + $0x20] sm:$0xf] %vm250, %v1313
    %v1316 = vld [vmem:[#allocation3] sm:$0xf]
    %v1317 = vld [vmem:[#allocation3 + $0x4] sm:$0xf]
    %v1318 = vld [vmem:[#allocation3 + $0x8] sm:$0xf]
    %v1319 = vld [vmem:[#allocation3 + $0xc] sm:$0xf]
    %v1320 = vld [vmem:[#allocation3 + $0x10] sm:$0xf]
    %v1321 = vld [vmem:[#allocation3 + $0x14] sm:$0xf]
    %v1322 = vld [vmem:[#allocation3 + $0x18] sm:$0xf]
    %v1323 = vld [vmem:[#allocation3 + $0x1c] sm:$0xf]
    %v1324 = vld [vmem:[#allocation3 + $0x20] sm:$0xf]
    %v1325 = vadd.f32 %v720, %v140
    %v1326 = vadd.f32 %v722, %v142
    %1327 = vst [vmem:[#allocation4] sm:$0xff] %v1325
    %1328 = vst [vmem:[#allocation4 + $0x8] sm:$0xff] %v1326
    %v1329 = vadd.f32 %v1151, %v145
    %1330 = vst [vmem:[#allocation4 + $0x10] sm:$0xff] %v1329
    %v1340 = vunpack.c.l.b16 %v1316
    %v1341 = vunpack.c.l.b16 %v1317
    %v1342 = vunpack.c.l.b16 %v1318
    %v1343 = vunpack.c.l.b16 %v1319
    %v1344 = vunpack.c.l.b16 %v1320
    %v1345 = vunpack.c.l.b16 %v1321
    %v1346 = vunpack.c.l.b16 %v1322
    %v1347 = vunpack.c.l.b16 %v1323
    %v1348 = vunpack.c.l.b16 %v1324
    %v1349 = vpack.c.b16 %v1341, %v1340
    %v1350 = vpack.c.b16 %v1343, %v1342
    %v1351 = vpack.c.b16 %v1345, %v1344
    %v1352 = vpack.c.b16 %v1347, %v1346
    %v1353 = vpack.c.b16 %v1348, %v1348
    %vm1358 = vcmask 588800
    %v1360 = vsel %vm1358, %v1169, 0
    %vm1362 = vcmask 1043456
    %v1364 = vsel %vm1362, %v1353, 0
    %1366 = vmatpush.bf16.msra.mxu0 0
    %1367 = vmatpush.bf16.msra.mxu0 0
    %1368 = vmatpush.bf16.msra.mxu0 0
    %1369 = vmatpush.bf16.msra.mxu0 %v1364
    %1370 = vmatpush.bf16.msra.mxu0 %v1352
    %1371 = vmatpush.bf16.msra.mxu0 %v1351
    %1372 = vmatpush.bf16.msra.mxu0 %v1350
    %1373 = vmatpush.bf16.msra.mxu0 %v1349
    %1374 = vmatmul.bf16.gmra.mxu0 %v1360
    %v1375 = vpop.f32.mrf.mxu0
    %v1376 = vadd.f32 %v147, %v1375
    %v1377 = vpop.f32.mrf.mxu0
    %1378 = vdwg.mxu0
    %1379 = vst [vmem:[#allocation4 + $0x18] sm:$0xff] %v1376
    // Predicated region
    $region54: #{tpu_custom_call.1} parent=1 // pred_check
      _
    $region55: #{tpu_custom_call.1} parent=1 // pred_check_branch
      %1381 = sbr.rel (0) target = $region57
    $region56: #{tpu_custom_call.1} parent=1 // pred_region
      %1383 = vsyncadd [#allocation5], 0
      %s1384 = sshll.u32 [#allocation4], 4
      %s1385 = int_to_ptr.vmem [resolvable:$true] %s1384
      %s1386 = sshll.u32 %s13, 4
      %s1387 = int_to_ptr.hbm [resolvable:$true] %s1386
      %1392 = dma.vmem_to_hbm [thread:$0]  %s1385, 512, %s1387, [#allocation5], 128, 128, 8
    $region57: #{tpu_custom_call.1} parent=1 // pred_fallthru
      _
    // Predicated region
    $region58: #{tpu_custom_call.1} parent=1 // pred_check
      _
    $region59: #{tpu_custom_call.1} parent=1 // pred_check_branch
      %1394 = sbr.rel (0) target = $region61
    $region60: #{tpu_custom_call.1} parent=1 // pred_region
      %1396 = dma.done [#allocation5], 512
    $region61: #{tpu_custom_call.1} parent=1 // pred_fallthru
      _
    %1397 = vsyncpa [#allocation5], 1

</llo_original>
